<compile_context>
chip_gen: v5e
topology: v5e:2x2
jax: 0.10.0
libtpu: 0.0.40
codegen_flags: <defaults>
</compile_context>

<pallas_src>
import math

import jax
import jax.numpy as jnp
from jax.experimental import pallas as pl
from jax.experimental.pallas import tpu as pltpu

# Small, module-consistent shapes.
B, S, D, H, DFF = 2, 8, 32, 4, 64
DH = D // H
N = B * S              # flattened token count
VEC_W = 3 * D          # width of the packed small-parameter slab (widest row = qkv bias)
LN_EPS = 1e-5


def _gelu_tanh(x):
    # nn.GELU() approximated with tanh (EUP path); |err| vs exact erf GELU < ~3e-4.
    c = math.sqrt(2.0 / math.pi)
    return 0.5 * x * (1.0 + jnp.tanh(c * (x + 0.044715 * x * x * x)))


def _layer_norm(x, g, b):
    mu = jnp.mean(x, axis=-1, keepdims=True)
    var = jnp.mean(jnp.square(x - mu), axis=-1, keepdims=True)
    return (x - mu) * jax.lax.rsqrt(var + LN_EPS) * g + b


def decoder_block_kernel(hidden_ref, mask_ref, wqkv_ref, wout_ref, w1_ref, w2_ref,
                         vec_ref, out_ref, k_out_ref, v_out_ref):
    h = hidden_ref[...].reshape(N, D)                    # [B*S, D]

    vec = vec_ref[...]                                   # [8, 3*D] packed small params
    ln1g, ln1b = vec[0:1, :D], vec[1:2, :D]
    bqkv = vec[2:3, :]
    bout = vec[3:4, :D]
    ln2g, ln2b = vec[4:5, :D], vec[5:6, :D]
    b1 = vec[6:7, :DFF]
    b2 = vec[7:8, :D]

    # --- attention branch (pre-LN) ---
    x = _layer_norm(h, ln1g, ln1b)
    qkv = jnp.dot(x, wqkv_ref[...], preferred_element_type=jnp.float32) + bqkv   # [B*S, 3D]
    k = qkv[:, D:2 * D]
    v = qkv[:, 2 * D:3 * D]

    # Lane-dense K/V cache outputs: one [B, S, D] store each (head split in the wrapper).
    k_out_ref[...] = k.reshape(B, S, D)
    v_out_ref[...] = v.reshape(B, S, D)

    # PyTorch divides scores by sqrt(dim) (not sqrt(head_dim)); fold it into q once.
    q = qkv[:, 0:D] * (1.0 / math.sqrt(D))

    # Mask predicate computed once, shared by all heads.
    neg = mask_ref[...] == 0                             # [B, S, S]

    attn_out = jnp.zeros((N, D), jnp.float32)
    for hh in range(H):                                  # static loop, H = 4
        lo, hi = hh * DH, (hh + 1) * DH
        qh = q[:, lo:hi].reshape(B, S, DH)
        kh = k[:, lo:hi].reshape(B, S, DH)
        vh = v[:, lo:hi].reshape(B, S, DH)
        s = jnp.einsum('bqd,bkd->bqk', qh, kh, preferred_element_type=jnp.float32)
        s = jnp.where(neg, -1000.0, s)
        s = s - jnp.max(s, axis=-1, keepdims=True)
        e = jnp.exp(s)
        attn = e * pl.reciprocal(jnp.sum(e, axis=-1, keepdims=True), approx=True)
        ctx = jnp.einsum('bqk,bkd->bqd', attn, vh, preferred_element_type=jnp.float32)
        # Fold this head's context directly into the output projection (no lane concat).
        attn_out = attn_out + jnp.dot(ctx.reshape(N, DH), wout_ref[lo:hi, :],
                                      preferred_element_type=jnp.float32)

    x1 = h + attn_out + bout

    # --- MLP branch ---
    y = _layer_norm(x1, ln2g, ln2b)
    h1 = _gelu_tanh(jnp.dot(y, w1_ref[...], preferred_element_type=jnp.float32) + b1)
    h2 = jnp.dot(h1, w2_ref[...], preferred_element_type=jnp.float32) + b2

    out_ref[...] = (x1 + h2).reshape(B, S, D)


def _pack_vectors(vs):
    """Pack the small 1-row parameter vectors into one [len(vs), VEC_W] f32 slab."""
    rows = []
    for v in vs:
        v = v.reshape(1, -1).astype(jnp.float32)
        rows.append(jnp.pad(v, ((0, 0), (0, VEC_W - v.shape[1]))))
    return jnp.concatenate(rows, axis=0)


def decoder_block(hidden, mask, params):
    (ln1g, ln1b, wqkv, bqkv, wout, bout, ln2g, ln2b, w1, b1, w2, b2) = params
    vec = _pack_vectors([ln1g, ln1b, bqkv, bout, ln2g, ln2b, b1, b2])   # [8, 3*D]

    full = lambda shape: pl.BlockSpec(shape, lambda i: (0,) * len(shape))
    out_shape = (
        jax.ShapeDtypeStruct((B, S, D), jnp.float32),   # block output
        jax.ShapeDtypeStruct((B, S, D), jnp.float32),   # k (lane-dense slab)
        jax.ShapeDtypeStruct((B, S, D), jnp.float32),   # v (lane-dense slab)
    )
    x_out, k_flat, v_flat = pl.pallas_call(
        decoder_block_kernel,
        out_shape=out_shape,
        grid=(1,),                                      # whole problem in a single grid step
        in_specs=[
            full((B, S, D)),      # hidden
            full((B, S, S)),      # mask
            full((D, 3 * D)),     # wqkv
            full((D, D)),         # wout
            full((D, DFF)),       # w1
            full((DFF, D)),       # w2
            full((8, VEC_W)),     # packed LN/bias vectors
        ],
        out_specs=[full((B, S, D)), full((B, S, D)), full((B, S, D))],
        compiler_params=pltpu.CompilerParams(dimension_semantics=("arbitrary",)),
    )(hidden, mask, wqkv, wout, w1, w2, vec)

    # [B, S, D] -> [B, H, S, DH] (PyTorch reshape + transpose) done outside the kernel.
    k_heads = k_flat.reshape(B, S, H, DH).transpose(0, 2, 1, 3)
    v_heads = v_flat.reshape(B, S, H, DH).transpose(0, 2, 1, 3)
    return x_out, k_heads, v_heads


def decoder_block_reference(hidden, mask, params):
    """Pure-JAX reference with the PyTorch module's semantics (exact-erf GELU)."""
    (ln1g, ln1b, wqkv, bqkv, wout, bout, ln2g, ln2b, w1, b1, w2, b2) = params
    x = _layer_norm(hidden, ln1g, ln1b)
    qkv = x @ wqkv + bqkv
    q, k, v = jnp.split(qkv, 3, axis=-1)

    heads = lambda t: t.reshape(B, S, H, DH).transpose(0, 2, 1, 3)
    qh, kh, vh = heads(q), heads(k), heads(v)
    score = jnp.einsum("bhqd,bhkd->bhqk", qh, kh) / math.sqrt(D)
    score = jnp.where(mask[:, None, :, :] == 0, -1000.0, score)
    attn = jax.nn.softmax(score, axis=-1)
    out = jnp.einsum("bhqk,bhkd->bhqd", attn, vh)
    out = out.transpose(0, 2, 1, 3).reshape(B, S, D)
    out = out @ wout + bout
    x1 = hidden + out
    y = _layer_norm(x1, ln2g, ln2b)
    mlp = jax.nn.gelu(y @ w1 + b1, approximate=False) @ w2 + b2
    return x1 + mlp, kh, vh


if __name__ == "__main__":
    key = jax.random.PRNGKey(0)
    ks = jax.random.split(key, 9)

    hidden = jax.random.normal(ks[0], (B, S, D), jnp.float32)
    # causal mask (non-zero = keep, 0 = masked), broadcast per batch
    mask = jnp.broadcast_to(jnp.tril(jnp.ones((S, S), jnp.float32)), (B, S, S))

    init = lambda k, shape: 0.05 * jax.random.normal(k, shape, jnp.float32)
    params = (
        jnp.ones((1, D), jnp.float32),   # ln1 gamma (nn.LayerNorm default)
        jnp.zeros((1, D), jnp.float32),  # ln1 beta
        init(ks[1], (D, 3 * D)),         # qkv_proj weight  [in, out]
        init(ks[2], (1, 3 * D)),         # qkv_proj bias
        init(ks[3], (D, D)),             # out_proj weight
        init(ks[4], (1, D)),             # out_proj bias
        jnp.ones((1, D), jnp.float32),   # ln2 gamma
        jnp.zeros((1, D), jnp.float32),  # ln2 beta
        init(ks[5], (D, DFF)),           # mlp_linear1 weight
        init(ks[6], (1, DFF)),           # mlp_linear1 bias
        init(ks[7], (DFF, D)),           # mlp_linear2 weight
        init(ks[8], (1, D)),             # mlp_linear2 bias
    )

    x_out, k_out, v_out = decoder_block(hidden, mask, params)
    jax.block_until_ready((x_out, k_out, v_out))

    x_ref, k_ref, v_ref = decoder_block_reference(hidden, mask, params)
    assert x_out.shape == (B, S, D) and k_out.shape == (B, H, S, DH) and v_out.shape == (B, H, S, DH)
    assert jnp.allclose(x_out, x_ref, atol=2e-3, rtol=2e-3), "x mismatch vs reference"
    assert jnp.allclose(k_out, k_ref, atol=2e-3, rtol=2e-3), "k mismatch vs reference"
    assert jnp.allclose(v_out, v_ref, atol=2e-3, rtol=2e-3), "v mismatch vs reference"

    print("KERNEL_OK")
</pallas_src>

<mosaic_0001>
module attributes {stable_mosaic.version = 11 : i64} {
  func.func @decoder_block_kernel(%arg0: i32, %arg1: memref<2x8x32xf32, #tpu.memory_space<vmem>>, %arg2: memref<2x8x8xf32, #tpu.memory_space<vmem>>, %arg3: memref<32x96xf32, #tpu.memory_space<vmem>>, %arg4: memref<32x32xf32, #tpu.memory_space<vmem>>, %arg5: memref<32x64xf32, #tpu.memory_space<vmem>>, %arg6: memref<64x32xf32, #tpu.memory_space<vmem>>, %arg7: memref<8x96xf32, #tpu.memory_space<vmem>>, %arg8: memref<2x8x32xf32, #tpu.memory_space<vmem>>, %arg9: memref<2x8x32xf32, #tpu.memory_space<vmem>>, %arg10: memref<2x8x32xf32, #tpu.memory_space<vmem>>) attributes {dimension_semantics = [#tpu.dimension_semantics<arbitrary>], iteration_bounds = array<i64: 1>, scalar_prefetch = 0 : i64, scratch_operands = 0 : i64, tpu.core_type = #tpu.core_type<tc>, window_params = [{pipeline_mode = #tpu.pipeline_mode<synchronous>, transform_indices = @transform_0, window_bounds = array<i64: 2, 8, 32>}, {pipeline_mode = #tpu.pipeline_mode<synchronous>, transform_indices = @transform_1, window_bounds = array<i64: 2, 8, 8>}, {pipeline_mode = #tpu.pipeline_mode<synchronous>, transform_indices = @transform_2, window_bounds = array<i64: 32, 96>}, {pipeline_mode = #tpu.pipeline_mode<synchronous>, transform_indices = @transform_3, window_bounds = array<i64: 32, 32>}, {pipeline_mode = #tpu.pipeline_mode<synchronous>, transform_indices = @transform_4, window_bounds = array<i64: 32, 64>}, {pipeline_mode = #tpu.pipeline_mode<synchronous>, transform_indices = @transform_5, window_bounds = array<i64: 64, 32>}, {pipeline_mode = #tpu.pipeline_mode<synchronous>, transform_indices = @transform_6, window_bounds = array<i64: 8, 96>}, {pipeline_mode = #tpu.pipeline_mode<synchronous>, transform_indices = @transform_7, window_bounds = array<i64: 2, 8, 32>}, {pipeline_mode = #tpu.pipeline_mode<synchronous>, transform_indices = @transform_8, window_bounds = array<i64: 2, 8, 32>}, {pipeline_mode = #tpu.pipeline_mode<synchronous>, transform_indices = @transform_9, window_bounds = array<i64: 2, 8, 32>}]} {
    %c0 = arith.constant 0 : index
    %c0_0 = arith.constant 0 : index
    %c0_1 = arith.constant 0 : index
    %0 = vector.load %arg1[%c0, %c0_0, %c0_1] : memref<2x8x32xf32, #tpu.memory_space<vmem>>, vector<2x8x32xf32>
    %1 = vector.shape_cast %0 : vector<2x8x32xf32> to vector<16x32xf32>
    %c0_2 = arith.constant 0 : index
    %c0_3 = arith.constant 0 : index
    %2 = vector.load %arg7[%c0_2, %c0_3] : memref<8x96xf32, #tpu.memory_space<vmem>>, vector<8x96xf32>
    %3 = vector.extract_strided_slice %2 {offsets = [0, 0], sizes = [1, 32], strides = [1, 1]} : vector<8x96xf32> to vector<1x32xf32>
    %4 = vector.extract_strided_slice %2 {offsets = [1, 0], sizes = [1, 32], strides = [1, 1]} : vector<8x96xf32> to vector<1x32xf32>
    %5 = vector.extract_strided_slice %2 {offsets = [2, 0], sizes = [1, 96], strides = [1, 1]} : vector<8x96xf32> to vector<1x96xf32>
    %6 = vector.extract_strided_slice %2 {offsets = [3, 0], sizes = [1, 32], strides = [1, 1]} : vector<8x96xf32> to vector<1x32xf32>
    %7 = vector.extract_strided_slice %2 {offsets = [4, 0], sizes = [1, 32], strides = [1, 1]} : vector<8x96xf32> to vector<1x32xf32>
    %8 = vector.extract_strided_slice %2 {offsets = [5, 0], sizes = [1, 32], strides = [1, 1]} : vector<8x96xf32> to vector<1x32xf32>
    %9 = vector.extract_strided_slice %2 {offsets = [6, 0], sizes = [1, 64], strides = [1, 1]} : vector<8x96xf32> to vector<1x64xf32>
    %10 = vector.extract_strided_slice %2 {offsets = [7, 0], sizes = [1, 32], strides = [1, 1]} : vector<8x96xf32> to vector<1x32xf32>
    %cst = arith.constant dense<0.000000e+00> : vector<16xf32>
    %11 = vector.multi_reduction <add>, %1, %cst [1] : vector<16x32xf32> to vector<16xf32>
    %12 = vector.shape_cast %11 : vector<16xf32> to vector<16x1xf32>
    %cst_4 = arith.constant 3.200000e+01 : f32
    %13 = vector.broadcast %cst_4 : f32 to vector<16x1xf32>
    %14 = arith.divf %12, %13 : vector<16x1xf32>
    %15 = vector.broadcast %14 : vector<16x1xf32> to vector<16x32xf32>
    %16 = arith.subf %1, %15 : vector<16x32xf32>
    %17 = arith.mulf %16, %16 : vector<16x32xf32>
    %cst_5 = arith.constant dense<0.000000e+00> : vector<16xf32>
    %18 = vector.multi_reduction <add>, %17, %cst_5 [1] : vector<16x32xf32> to vector<16xf32>
    %19 = vector.shape_cast %18 : vector<16xf32> to vector<16x1xf32>
    %cst_6 = arith.constant 3.200000e+01 : f32
    %20 = vector.broadcast %cst_6 : f32 to vector<16x1xf32>
    %21 = arith.divf %19, %20 : vector<16x1xf32>
    %22 = vector.broadcast %14 : vector<16x1xf32> to vector<16x32xf32>
    %23 = arith.subf %1, %22 : vector<16x32xf32>
    %cst_7 = arith.constant 9.99999974E-6 : f32
    %24 = vector.broadcast %cst_7 : f32 to vector<16x1xf32>
    %25 = arith.addf %21, %24 : vector<16x1xf32>
    %26 = math.rsqrt %25 : vector<16x1xf32>
    %27 = vector.broadcast %26 : vector<16x1xf32> to vector<16x32xf32>
    %28 = arith.mulf %23, %27 : vector<16x32xf32>
    %29 = vector.broadcast %3 : vector<1x32xf32> to vector<16x32xf32>
    %30 = arith.mulf %28, %29 : vector<16x32xf32>
    %31 = vector.broadcast %4 : vector<1x32xf32> to vector<16x32xf32>
    %32 = arith.addf %30, %31 : vector<16x32xf32>
    %c0_8 = arith.constant 0 : index
    %c0_9 = arith.constant 0 : index
    %33 = vector.load %arg3[%c0_8, %c0_9] : memref<32x96xf32, #tpu.memory_space<vmem>>, vector<32x96xf32>
    %cst_10 = arith.constant dense<0.000000e+00> : vector<16x96xf32>
    %34 = tpu.matmul %32, %33, %cst_10 {dimension_numbers = #tpu.dot_dimension_numbers<[1], [0], [0], [1], [0, 0, 1, 1], [], []>} : vector<16x32xf32>, vector<32x96xf32>, vector<16x96xf32> -> vector<16x96xf32>
    %35 = vector.broadcast %5 : vector<1x96xf32> to vector<16x96xf32>
    %36 = arith.addf %34, %35 : vector<16x96xf32>
    %37 = vector.extract_strided_slice %36 {offsets = [0, 32], sizes = [16, 32], strides = [1, 1]} : vector<16x96xf32> to vector<16x32xf32>
    %38 = vector.extract_strided_slice %36 {offsets = [0, 64], sizes = [16, 32], strides = [1, 1]} : vector<16x96xf32> to vector<16x32xf32>
    %39 = vector.shape_cast %37 : vector<16x32xf32> to vector<2x8x32xf32>
    %c0_11 = arith.constant 0 : index
    %c0_12 = arith.constant 0 : index
    %c0_13 = arith.constant 0 : index
    %40 = vector.load %arg9[%c0_11, %c0_12, %c0_13] : memref<2x8x32xf32, #tpu.memory_space<vmem>>, vector<2x8x32xf32>
    tpu.vector_store %arg9[%c0_11, %c0_12, %c0_13], %39 {strides = array<i32>} : memref<2x8x32xf32, #tpu.memory_space<vmem>>, vector<2x8x32xf32>,
    %41 = vector.shape_cast %38 : vector<16x32xf32> to vector<2x8x32xf32>
    %c0_14 = arith.constant 0 : index
    %c0_15 = arith.constant 0 : index
    %c0_16 = arith.constant 0 : index
    %42 = vector.load %arg10[%c0_14, %c0_15, %c0_16] : memref<2x8x32xf32, #tpu.memory_space<vmem>>, vector<2x8x32xf32>
    tpu.vector_store %arg10[%c0_14, %c0_15, %c0_16], %41 {strides = array<i32>} : memref<2x8x32xf32, #tpu.memory_space<vmem>>, vector<2x8x32xf32>,
    %43 = vector.extract_strided_slice %36 {offsets = [0, 0], sizes = [16, 32], strides = [1, 1]} : vector<16x96xf32> to vector<16x32xf32>
    %cst_17 = arith.constant 0.176776692 : f32
    %44 = vector.broadcast %cst_17 : f32 to vector<16x32xf32>
    %45 = arith.mulf %43, %44 : vector<16x32xf32>
    %c0_18 = arith.constant 0 : index
    %c0_19 = arith.constant 0 : index
    %c0_20 = arith.constant 0 : index
    %46 = vector.load %arg2[%c0_18, %c0_19, %c0_20] : memref<2x8x8xf32, #tpu.memory_space<vmem>>, vector<2x8x8xf32>
    %cst_21 = arith.constant 0.000000e+00 : f32
    %47 = vector.broadcast %cst_21 : f32 to vector<2x8x8xf32>
    %48 = arith.cmpf oeq, %46, %47 : vector<2x8x8xf32>
    %cst_22 = arith.constant 0.000000e+00 : f32
    %49 = vector.broadcast %cst_22 : f32 to vector<16x32xf32>
    %50 = vector.extract_strided_slice %45 {offsets = [0, 0], sizes = [16, 8], strides = [1, 1]} : vector<16x32xf32> to vector<16x8xf32>
    %51 = vector.shape_cast %50 : vector<16x8xf32> to vector<2x8x8xf32>
    %52 = vector.extract_strided_slice %37 {offsets = [0, 0], sizes = [16, 8], strides = [1, 1]} : vector<16x32xf32> to vector<16x8xf32>
    %53 = vector.shape_cast %52 : vector<16x8xf32> to vector<2x8x8xf32>
    %54 = vector.extract_strided_slice %38 {offsets = [0, 0], sizes = [16, 8], strides = [1, 1]} : vector<16x32xf32> to vector<16x8xf32>
    %55 = vector.shape_cast %54 : vector<16x8xf32> to vector<2x8x8xf32>
    "tpu.trace_start"() <{level = 10 : i32, message = "bqd,bkd->bqk"}> : () -> ()
    %cst_23 = arith.constant dense<0.000000e+00> : vector<2x8x8xf32>
    %56 = tpu.matmul %51, %53, %cst_23 {dimension_numbers = #tpu.dot_dimension_numbers<[2], [2], [1], [1], [0, 0, 0, 1, 1, 1], [0], [0]>} : vector<2x8x8xf32>, vector<2x8x8xf32>, vector<2x8x8xf32> -> vector<2x8x8xf32>
    %cst_24 = arith.constant -1.000000e+03 : f32
    "tpu.trace_stop"() : () -> ()
    %57 = vector.broadcast %cst_24 : f32 to vector<2x8x8xf32>
    %58 = arith.select %48, %57, %56 : vector<2x8x8xi1>, vector<2x8x8xf32>
    %cst_25 = arith.constant dense<0xFF800000> : vector<2x8xf32>
    %59 = vector.multi_reduction <maximumf>, %58, %cst_25 [2] : vector<2x8x8xf32> to vector<2x8xf32>
    %60 = vector.shape_cast %59 : vector<2x8xf32> to vector<2x8x1xf32>
    %61 = vector.broadcast %60 : vector<2x8x1xf32> to vector<2x8x8xf32>
    %62 = arith.subf %58, %61 : vector<2x8x8xf32>
    %63 = math.exp %62 : vector<2x8x8xf32>
    %cst_26 = arith.constant dense<0.000000e+00> : vector<2x8xf32>
    %64 = vector.multi_reduction <add>, %63, %cst_26 [2] : vector<2x8x8xf32> to vector<2x8xf32>
    %65 = vector.shape_cast %64 : vector<2x8xf32> to vector<2x8x1xf32>
    %66 = tpu.reciprocal %65 {approx = true} : vector<2x8x1xf32> -> vector<2x8x1xf32>
    %67 = vector.broadcast %66 : vector<2x8x1xf32> to vector<2x8x8xf32>
    %68 = arith.mulf %63, %67 : vector<2x8x8xf32>
    "tpu.trace_start"() <{level = 10 : i32, message = "bqk,bkd->bqd"}> : () -> ()
    %cst_27 = arith.constant dense<0.000000e+00> : vector<2x8x8xf32>
    %69 = tpu.matmul %68, %55, %cst_27 {dimension_numbers = #tpu.dot_dimension_numbers<[2], [1], [1], [2], [0, 0, 0, 1, 1, 2], [0], [0]>} : vector<2x8x8xf32>, vector<2x8x8xf32>, vector<2x8x8xf32> -> vector<2x8x8xf32>
    "tpu.trace_stop"() : () -> ()
    %70 = vector.shape_cast %69 : vector<2x8x8xf32> to vector<16x8xf32>
    %c0_28 = arith.constant 0 : index
    %c0_29 = arith.constant 0 : index
    %71 = vector.load %arg4[%c0_28, %c0_29] : memref<32x32xf32, #tpu.memory_space<vmem>>, vector<8x32xf32>
    %cst_30 = arith.constant dense<0.000000e+00> : vector<16x32xf32>
    %72 = tpu.matmul %70, %71, %cst_30 {dimension_numbers = #tpu.dot_dimension_numbers<[1], [0], [0], [1], [0, 0, 1, 1], [], []>} : vector<16x8xf32>, vector<8x32xf32>, vector<16x32xf32> -> vector<16x32xf32>
    %73 = arith.addf %49, %72 : vector<16x32xf32>
    %74 = vector.extract_strided_slice %45 {offsets = [0, 8], sizes = [16, 8], strides = [1, 1]} : vector<16x32xf32> to vector<16x8xf32>
    %75 = vector.shape_cast %74 : vector<16x8xf32> to vector<2x8x8xf32>
    %76 = vector.extract_strided_slice %37 {offsets = [0, 8], sizes = [16, 8], strides = [1, 1]} : vector<16x32xf32> to vector<16x8xf32>
    %77 = vector.shape_cast %76 : vector<16x8xf32> to vector<2x8x8xf32>
    %78 = vector.extract_strided_slice %38 {offsets = [0, 8], sizes = [16, 8], strides = [1, 1]} : vector<16x32xf32> to vector<16x8xf32>
    %79 = vector.shape_cast %78 : vector<16x8xf32> to vector<2x8x8xf32>
    "tpu.trace_start"() <{level = 10 : i32, message = "bqd,bkd->bqk"}> : () -> ()
    %cst_31 = arith.constant dense<0.000000e+00> : vector<2x8x8xf32>
    %80 = tpu.matmul %75, %77, %cst_31 {dimension_numbers = #tpu.dot_dimension_numbers<[2], [2], [1], [1], [0, 0, 0, 1, 1, 1], [0], [0]>} : vector<2x8x8xf32>, vector<2x8x8xf32>, vector<2x8x8xf32> -> vector<2x8x8xf32>
    %cst_32 = arith.constant -1.000000e+03 : f32
    "tpu.trace_stop"() : () -> ()
    %81 = vector.broadcast %cst_32 : f32 to vector<2x8x8xf32>
    %82 = arith.select %48, %81, %80 : vector<2x8x8xi1>, vector<2x8x8xf32>
    %cst_33 = arith.constant dense<0xFF800000> : vector<2x8xf32>
    %83 = vector.multi_reduction <maximumf>, %82, %cst_33 [2] : vector<2x8x8xf32> to vector<2x8xf32>
    %84 = vector.shape_cast %83 : vector<2x8xf32> to vector<2x8x1xf32>
    %85 = vector.broadcast %84 : vector<2x8x1xf32> to vector<2x8x8xf32>
    %86 = arith.subf %82, %85 : vector<2x8x8xf32>
    %87 = math.exp %86 : vector<2x8x8xf32>
    %cst_34 = arith.constant dense<0.000000e+00> : vector<2x8xf32>
    %88 = vector.multi_reduction <add>, %87, %cst_34 [2] : vector<2x8x8xf32> to vector<2x8xf32>
    %89 = vector.shape_cast %88 : vector<2x8xf32> to vector<2x8x1xf32>
    %90 = tpu.reciprocal %89 {approx = true} : vector<2x8x1xf32> -> vector<2x8x1xf32>
    %91 = vector.broadcast %90 : vector<2x8x1xf32> to vector<2x8x8xf32>
    %92 = arith.mulf %87, %91 : vector<2x8x8xf32>
    "tpu.trace_start"() <{level = 10 : i32, message = "bqk,bkd->bqd"}> : () -> ()
    %cst_35 = arith.constant dense<0.000000e+00> : vector<2x8x8xf32>
    %93 = tpu.matmul %92, %79, %cst_35 {dimension_numbers = #tpu.dot_dimension_numbers<[2], [1], [1], [2], [0, 0, 0, 1, 1, 2], [0], [0]>} : vector<2x8x8xf32>, vector<2x8x8xf32>, vector<2x8x8xf32> -> vector<2x8x8xf32>
    "tpu.trace_stop"() : () -> ()
    %94 = vector.shape_cast %93 : vector<2x8x8xf32> to vector<16x8xf32>
    %c8 = arith.constant 8 : index
    %c0_36 = arith.constant 0 : index
    %95 = vector.load %arg4[%c8, %c0_36] : memref<32x32xf32, #tpu.memory_space<vmem>>, vector<8x32xf32>
    %cst_37 = arith.constant dense<0.000000e+00> : vector<16x32xf32>
    %96 = tpu.matmul %94, %95, %cst_37 {dimension_numbers = #tpu.dot_dimension_numbers<[1], [0], [0], [1], [0, 0, 1, 1], [], []>} : vector<16x8xf32>, vector<8x32xf32>, vector<16x32xf32> -> vector<16x32xf32>
    %97 = arith.addf %73, %96 : vector<16x32xf32>
    %98 = vector.extract_strided_slice %45 {offsets = [0, 16], sizes = [16, 8], strides = [1, 1]} : vector<16x32xf32> to vector<16x8xf32>
    %99 = vector.shape_cast %98 : vector<16x8xf32> to vector<2x8x8xf32>
    %100 = vector.extract_strided_slice %37 {offsets = [0, 16], sizes = [16, 8], strides = [1, 1]} : vector<16x32xf32> to vector<16x8xf32>
    %101 = vector.shape_cast %100 : vector<16x8xf32> to vector<2x8x8xf32>
    %102 = vector.extract_strided_slice %38 {offsets = [0, 16], sizes = [16, 8], strides = [1, 1]} : vector<16x32xf32> to vector<16x8xf32>
    %103 = vector.shape_cast %102 : vector<16x8xf32> to vector<2x8x8xf32>
    "tpu.trace_start"() <{level = 10 : i32, message = "bqd,bkd->bqk"}> : () -> ()
    %cst_38 = arith.constant dense<0.000000e+00> : vector<2x8x8xf32>
    %104 = tpu.matmul %99, %101, %cst_38 {dimension_numbers = #tpu.dot_dimension_numbers<[2], [2], [1], [1], [0, 0, 0, 1, 1, 1], [0], [0]>} : vector<2x8x8xf32>, vector<2x8x8xf32>, vector<2x8x8xf32> -> vector<2x8x8xf32>
    %cst_39 = arith.constant -1.000000e+03 : f32
    "tpu.trace_stop"() : () -> ()
    %105 = vector.broadcast %cst_39 : f32 to vector<2x8x8xf32>
    %106 = arith.select %48, %105, %104 : vector<2x8x8xi1>, vector<2x8x8xf32>
    %cst_40 = arith.constant dense<0xFF800000> : vector<2x8xf32>
    %107 = vector.multi_reduction <maximumf>, %106, %cst_40 [2] : vector<2x8x8xf32> to vector<2x8xf32>
    %108 = vector.shape_cast %107 : vector<2x8xf32> to vector<2x8x1xf32>
    %109 = vector.broadcast %108 : vector<2x8x1xf32> to vector<2x8x8xf32>
    %110 = arith.subf %106, %109 : vector<2x8x8xf32>
    %111 = math.exp %110 : vector<2x8x8xf32>
    %cst_41 = arith.constant dense<0.000000e+00> : vector<2x8xf32>
    %112 = vector.multi_reduction <add>, %111, %cst_41 [2] : vector<2x8x8xf32> to vector<2x8xf32>
    %113 = vector.shape_cast %112 : vector<2x8xf32> to vector<2x8x1xf32>
    %114 = tpu.reciprocal %113 {approx = true} : vector<2x8x1xf32> -> vector<2x8x1xf32>
    %115 = vector.broadcast %114 : vector<2x8x1xf32> to vector<2x8x8xf32>
    %116 = arith.mulf %111, %115 : vector<2x8x8xf32>
    "tpu.trace_start"() <{level = 10 : i32, message = "bqk,bkd->bqd"}> : () -> ()
    %cst_42 = arith.constant dense<0.000000e+00> : vector<2x8x8xf32>
    %117 = tpu.matmul %116, %103, %cst_42 {dimension_numbers = #tpu.dot_dimension_numbers<[2], [1], [1], [2], [0, 0, 0, 1, 1, 2], [0], [0]>} : vector<2x8x8xf32>, vector<2x8x8xf32>, vector<2x8x8xf32> -> vector<2x8x8xf32>
    "tpu.trace_stop"() : () -> ()
    %118 = vector.shape_cast %117 : vector<2x8x8xf32> to vector<16x8xf32>
    %c16 = arith.constant 16 : index
    %c0_43 = arith.constant 0 : index
    %119 = vector.load %arg4[%c16, %c0_43] : memref<32x32xf32, #tpu.memory_space<vmem>>, vector<8x32xf32>
    %cst_44 = arith.constant dense<0.000000e+00> : vector<16x32xf32>
    %120 = tpu.matmul %118, %119, %cst_44 {dimension_numbers = #tpu.dot_dimension_numbers<[1], [0], [0], [1], [0, 0, 1, 1], [], []>} : vector<16x8xf32>, vector<8x32xf32>, vector<16x32xf32> -> vector<16x32xf32>
    %121 = arith.addf %97, %120 : vector<16x32xf32>
    %122 = vector.extract_strided_slice %45 {offsets = [0, 24], sizes = [16, 8], strides = [1, 1]} : vector<16x32xf32> to vector<16x8xf32>
    %123 = vector.shape_cast %122 : vector<16x8xf32> to vector<2x8x8xf32>
    %124 = vector.extract_strided_slice %37 {offsets = [0, 24], sizes = [16, 8], strides = [1, 1]} : vector<16x32xf32> to vector<16x8xf32>
    %125 = vector.shape_cast %124 : vector<16x8xf32> to vector<2x8x8xf32>
    %126 = vector.extract_strided_slice %38 {offsets = [0, 24], sizes = [16, 8], strides = [1, 1]} : vector<16x32xf32> to vector<16x8xf32>
    %127 = vector.shape_cast %126 : vector<16x8xf32> to vector<2x8x8xf32>
    "tpu.trace_start"() <{level = 10 : i32, message = "bqd,bkd->bqk"}> : () -> ()
    %cst_45 = arith.constant dense<0.000000e+00> : vector<2x8x8xf32>
    %128 = tpu.matmul %123, %125, %cst_45 {dimension_numbers = #tpu.dot_dimension_numbers<[2], [2], [1], [1], [0, 0, 0, 1, 1, 1], [0], [0]>} : vector<2x8x8xf32>, vector<2x8x8xf32>, vector<2x8x8xf32> -> vector<2x8x8xf32>
    %cst_46 = arith.constant -1.000000e+03 : f32
    "tpu.trace_stop"() : () -> ()
    %129 = vector.broadcast %cst_46 : f32 to vector<2x8x8xf32>
    %130 = arith.select %48, %129, %128 : vector<2x8x8xi1>, vector<2x8x8xf32>
    %cst_47 = arith.constant dense<0xFF800000> : vector<2x8xf32>
    %131 = vector.multi_reduction <maximumf>, %130, %cst_47 [2] : vector<2x8x8xf32> to vector<2x8xf32>
    %132 = vector.shape_cast %131 : vector<2x8xf32> to vector<2x8x1xf32>
    %133 = vector.broadcast %132 : vector<2x8x1xf32> to vector<2x8x8xf32>
    %134 = arith.subf %130, %133 : vector<2x8x8xf32>
    %135 = math.exp %134 : vector<2x8x8xf32>
    %cst_48 = arith.constant dense<0.000000e+00> : vector<2x8xf32>
    %136 = vector.multi_reduction <add>, %135, %cst_48 [2] : vector<2x8x8xf32> to vector<2x8xf32>
    %137 = vector.shape_cast %136 : vector<2x8xf32> to vector<2x8x1xf32>
    %138 = tpu.reciprocal %137 {approx = true} : vector<2x8x1xf32> -> vector<2x8x1xf32>
    %139 = vector.broadcast %138 : vector<2x8x1xf32> to vector<2x8x8xf32>
    %140 = arith.mulf %135, %139 : vector<2x8x8xf32>
    "tpu.trace_start"() <{level = 10 : i32, message = "bqk,bkd->bqd"}> : () -> ()
    %cst_49 = arith.constant dense<0.000000e+00> : vector<2x8x8xf32>
    %141 = tpu.matmul %140, %127, %cst_49 {dimension_numbers = #tpu.dot_dimension_numbers<[2], [1], [1], [2], [0, 0, 0, 1, 1, 2], [0], [0]>} : vector<2x8x8xf32>, vector<2x8x8xf32>, vector<2x8x8xf32> -> vector<2x8x8xf32>
    "tpu.trace_stop"() : () -> ()
    %142 = vector.shape_cast %141 : vector<2x8x8xf32> to vector<16x8xf32>
    %c24 = arith.constant 24 : index
    %c0_50 = arith.constant 0 : index
    %143 = vector.load %arg4[%c24, %c0_50] : memref<32x32xf32, #tpu.memory_space<vmem>>, vector<8x32xf32>
    %cst_51 = arith.constant dense<0.000000e+00> : vector<16x32xf32>
    %144 = tpu.matmul %142, %143, %cst_51 {dimension_numbers = #tpu.dot_dimension_numbers<[1], [0], [0], [1], [0, 0, 1, 1], [], []>} : vector<16x8xf32>, vector<8x32xf32>, vector<16x32xf32> -> vector<16x32xf32>
    %145 = arith.addf %121, %144 : vector<16x32xf32>
    %146 = arith.addf %1, %145 : vector<16x32xf32>
    %147 = vector.broadcast %6 : vector<1x32xf32> to vector<16x32xf32>
    %148 = arith.addf %146, %147 : vector<16x32xf32>
    %cst_52 = arith.constant dense<0.000000e+00> : vector<16xf32>
    %149 = vector.multi_reduction <add>, %148, %cst_52 [1] : vector<16x32xf32> to vector<16xf32>
    %150 = vector.shape_cast %149 : vector<16xf32> to vector<16x1xf32>
    %cst_53 = arith.constant 3.200000e+01 : f32
    %151 = vector.broadcast %cst_53 : f32 to vector<16x1xf32>
    %152 = arith.divf %150, %151 : vector<16x1xf32>
    %153 = vector.broadcast %152 : vector<16x1xf32> to vector<16x32xf32>
    %154 = arith.subf %148, %153 : vector<16x32xf32>
    %155 = arith.mulf %154, %154 : vector<16x32xf32>
    %cst_54 = arith.constant dense<0.000000e+00> : vector<16xf32>
    %156 = vector.multi_reduction <add>, %155, %cst_54 [1] : vector<16x32xf32> to vector<16xf32>
    %157 = vector.shape_cast %156 : vector<16xf32> to vector<16x1xf32>
    %cst_55 = arith.constant 3.200000e+01 : f32
    %158 = vector.broadcast %cst_55 : f32 to vector<16x1xf32>
    %159 = arith.divf %157, %158 : vector<16x1xf32>
    %160 = vector.broadcast %152 : vector<16x1xf32> to vector<16x32xf32>
    %161 = arith.subf %148, %160 : vector<16x32xf32>
    %cst_56 = arith.constant 9.99999974E-6 : f32
    %162 = vector.broadcast %cst_56 : f32 to vector<16x1xf32>
    %163 = arith.addf %159, %162 : vector<16x1xf32>
    %164 = math.rsqrt %163 : vector<16x1xf32>
    %165 = vector.broadcast %164 : vector<16x1xf32> to vector<16x32xf32>
    %166 = arith.mulf %161, %165 : vector<16x32xf32>
    %167 = vector.broadcast %7 : vector<1x32xf32> to vector<16x32xf32>
    %168 = arith.mulf %166, %167 : vector<16x32xf32>
    %169 = vector.broadcast %8 : vector<1x32xf32> to vector<16x32xf32>
    %170 = arith.addf %168, %169 : vector<16x32xf32>
    %c0_57 = arith.constant 0 : index
    %c0_58 = arith.constant 0 : index
    %171 = vector.load %arg5[%c0_57, %c0_58] : memref<32x64xf32, #tpu.memory_space<vmem>>, vector<32x64xf32>
    %cst_59 = arith.constant dense<0.000000e+00> : vector<16x64xf32>
    %172 = tpu.matmul %170, %171, %cst_59 {dimension_numbers = #tpu.dot_dimension_numbers<[1], [0], [0], [1], [0, 0, 1, 1], [], []>} : vector<16x32xf32>, vector<32x64xf32>, vector<16x64xf32> -> vector<16x64xf32>
    %173 = vector.broadcast %9 : vector<1x64xf32> to vector<16x64xf32>
    %174 = arith.addf %172, %173 : vector<16x64xf32>
    %cst_60 = arith.constant 5.000000e-01 : f32
    %175 = vector.broadcast %cst_60 : f32 to vector<16x64xf32>
    %176 = arith.mulf %175, %174 : vector<16x64xf32>
    %cst_61 = arith.constant 4.471500e-02 : f32
    %177 = vector.broadcast %cst_61 : f32 to vector<16x64xf32>
    %178 = arith.mulf %177, %174 : vector<16x64xf32>
    %179 = arith.mulf %178, %174 : vector<16x64xf32>
    %180 = arith.mulf %179, %174 : vector<16x64xf32>
    %181 = arith.addf %174, %180 : vector<16x64xf32>
    %cst_62 = arith.constant 0.797884583 : f32
    %182 = vector.broadcast %cst_62 : f32 to vector<16x64xf32>
    %183 = arith.mulf %182, %181 : vector<16x64xf32>
    %184 = math.tanh %183 : vector<16x64xf32>
    %cst_63 = arith.constant 1.000000e+00 : f32
    %185 = vector.broadcast %cst_63 : f32 to vector<16x64xf32>
    %186 = arith.addf %185, %184 : vector<16x64xf32>
    %187 = arith.mulf %176, %186 : vector<16x64xf32>
    %c0_64 = arith.constant 0 : index
    %c0_65 = arith.constant 0 : index
    %188 = vector.load %arg6[%c0_64, %c0_65] : memref<64x32xf32, #tpu.memory_space<vmem>>, vector<64x32xf32>
    %cst_66 = arith.constant dense<0.000000e+00> : vector<16x32xf32>
    %189 = tpu.matmul %187, %188, %cst_66 {dimension_numbers = #tpu.dot_dimension_numbers<[1], [0], [0], [1], [0, 0, 1, 1], [], []>} : vector<16x64xf32>, vector<64x32xf32>, vector<16x32xf32> -> vector<16x32xf32>
    %190 = vector.broadcast %10 : vector<1x32xf32> to vector<16x32xf32>
    %191 = arith.addf %189, %190 : vector<16x32xf32>
    %192 = arith.addf %148, %191 : vector<16x32xf32>
    %193 = vector.shape_cast %192 : vector<16x32xf32> to vector<2x8x32xf32>
    %c0_67 = arith.constant 0 : index
    %c0_68 = arith.constant 0 : index
    %c0_69 = arith.constant 0 : index
    %194 = vector.load %arg8[%c0_67, %c0_68, %c0_69] : memref<2x8x32xf32, #tpu.memory_space<vmem>>, vector<2x8x32xf32>
    tpu.vector_store %arg8[%c0_67, %c0_68, %c0_69], %193 {strides = array<i32>} : memref<2x8x32xf32, #tpu.memory_space<vmem>>, vector<2x8x32xf32>,
    return
  }
  func.func @transform_0(%arg0: i32) -> (i32, i32, i32) {
    %c0_i32 = arith.constant 0 : i32
    %c0_i32_0 = arith.constant 0 : i32
    %c0_i32_1 = arith.constant 0 : i32
    %c0_i32_2 = arith.constant 0 : i32
    return %c0_i32, %c0_i32_0, %c0_i32_1 : i32, i32, i32
  }
  func.func @transform_1(%arg0: i32) -> (i32, i32, i32) {
    %c0_i32 = arith.constant 0 : i32
    %c0_i32_0 = arith.constant 0 : i32
    %c0_i32_1 = arith.constant 0 : i32
    %c0_i32_2 = arith.constant 0 : i32
    return %c0_i32, %c0_i32_0, %c0_i32_1 : i32, i32, i32
  }
  func.func @transform_2(%arg0: i32) -> (i32, i32) {
    %c0_i32 = arith.constant 0 : i32
    %c0_i32_0 = arith.constant 0 : i32
    %c0_i32_1 = arith.constant 0 : i32
    return %c0_i32, %c0_i32_0 : i32, i32
  }
  func.func @transform_3(%arg0: i32) -> (i32, i32) {
    %c0_i32 = arith.constant 0 : i32
    %c0_i32_0 = arith.constant 0 : i32
    %c0_i32_1 = arith.constant 0 : i32
    return %c0_i32, %c0_i32_0 : i32, i32
  }
  func.func @transform_4(%arg0: i32) -> (i32, i32) {
    %c0_i32 = arith.constant 0 : i32
    %c0_i32_0 = arith.constant 0 : i32
    %c0_i32_1 = arith.constant 0 : i32
    return %c0_i32, %c0_i32_0 : i32, i32
  }
  func.func @transform_5(%arg0: i32) -> (i32, i32) {
    %c0_i32 = arith.constant 0 : i32
    %c0_i32_0 = arith.constant 0 : i32
    %c0_i32_1 = arith.constant 0 : i32
    return %c0_i32, %c0_i32_0 : i32, i32
  }
  func.func @transform_6(%arg0: i32) -> (i32, i32) {
    %c0_i32 = arith.constant 0 : i32
    %c0_i32_0 = arith.constant 0 : i32
    %c0_i32_1 = arith.constant 0 : i32
    return %c0_i32, %c0_i32_0 : i32, i32
  }
  func.func @transform_7(%arg0: i32) -> (i32, i32, i32) {
    %c0_i32 = arith.constant 0 : i32
    %c0_i32_0 = arith.constant 0 : i32
    %c0_i32_1 = arith.constant 0 : i32
    %c0_i32_2 = arith.constant 0 : i32
    return %c0_i32, %c0_i32_0, %c0_i32_1 : i32, i32, i32
  }
  func.func @transform_8(%arg0: i32) -> (i32, i32, i32) {
    %c0_i32 = arith.constant 0 : i32
    %c0_i32_0 = arith.constant 0 : i32
    %c0_i32_1 = arith.constant 0 : i32
    %c0_i32_2 = arith.constant 0 : i32
    return %c0_i32, %c0_i32_0, %c0_i32_1 : i32, i32, i32
  }
  func.func @transform_9(%arg0: i32) -> (i32, i32, i32) {
    %c0_i32 = arith.constant 0 : i32
    %c0_i32_0 = arith.constant 0 : i32
    %c0_i32_1 = arith.constant 0 : i32
    %c0_i32_2 = arith.constant 0 : i32
    return %c0_i32, %c0_i32_0, %c0_i32_1 : i32, i32, i32
  }
}

</mosaic_0001>

<llo_original>
// kernel: tpu_custom_call.1
$region0: #{tpu_custom_call.1}
  #allocation0 [shape = 'u32[]', space=smem, size = 0x4, offset = 0x4, fixed_abs, tag = 'smem constant byte address 0x4 - core index']
  #allocation1 [shape = 'u32[72,128]{1,0:T(1,128)}', space=vmem, size = 0x9000, scoped, tag = 'internal scratch']
  %s0 = inlined_call_operand.hbm [shape: f32[2,8,32], index: 0, kind: input, shape index: {}]
  %s1 = inlined_call_operand.hbm [shape: f32[2,8,8], index: 1, kind: input, shape index: {}]
  %s2 = inlined_call_operand.vmem [shape: f32[32,96], index: 2, kind: input, shape index: {}]
  %s3 = inlined_call_operand.vmem [shape: f32[32,32], index: 3, kind: input, shape index: {}]
  %s4 = inlined_call_operand.vmem [shape: f32[32,64], index: 4, kind: input, shape index: {}]
  %s5 = inlined_call_operand.vmem [shape: f32[64,32], index: 5, kind: input, shape index: {}]
  %s6 = inlined_call_operand.hbm [shape: f32[8,96], index: 6, kind: input, shape index: {}]
  %s7 = inlined_call_operand.hbm [shape: f32[2,8,32], index: 7, kind: output, shape index: {0}]
  %s8 = inlined_call_operand.hbm [shape: f32[2,8,32], index: 8, kind: output, shape index: {1}]
  %s9 = inlined_call_operand.hbm [shape: f32[2,8,32], index: 9, kind: output, shape index: {2}]
  %10 = xla_tuple %s7, %s8, %s9
  %s11 = sld [smem:[#allocation0]]
  $region66: #{tpu_custom_call.1} parent=0
    _
  %s13 = ssub.s32 1, %s11
  %s14 = scalar_select 0, %s13, %s11
  $region1: #{tpu_custom_call.1} parent=0
    #allocation2 [shape = 'u8[8192]{0}', space=vmem, size = 0x2000, scoped, tag = 'input window, operand 0, single buffered']
    #allocation3 [shape = 's32[1]{0}', space=sflag, size = 0x4, scoped, tag = 'scoped memory for tpu_custom_call.1']
    #allocation4 [shape = 's32[1]{0}', space=sflag, size = 0x4, scoped, tag = 'scoped memory for tpu_custom_call.1']
    #allocation5 [shape = 'u8[8192]{0}', space=vmem, size = 0x2000, scoped, tag = 'input window, operand 1, single buffered']
    #allocation6 [shape = 's32[1]{0}', space=sflag, size = 0x4, scoped, tag = 'scoped memory for tpu_custom_call.1']
    #allocation7 [shape = 'u8[4096]{0}', space=vmem, size = 0x1000, scoped, tag = 'input window, operand 6, single buffered']
    #allocation8 [shape = 'u8[8192]{0}', space=vmem, size = 0x2000, scoped, tag = 'output window, operand 0, single buffered']
    #allocation9 [shape = 'u8[8192]{0}', space=vmem, size = 0x2000, scoped, tag = 'output window, operand 1, single buffered']
    #allocation10 [shape = 's32[1]{0}', space=sflag, size = 0x4, scoped, tag = 'scoped memory for tpu_custom_call.1']
    #allocation11 [shape = 'u8[8192]{0}', space=vmem, size = 0x2000, scoped, tag = 'output window, operand 2, single buffered']
    %15 = vsyncpa [#allocation3], 0
    %16 = vsyncpa [#allocation6], 0
    %17 = vsyncpa [#allocation4], 0
    %18 = vsyncpa [#allocation10], 0
    // Predicated region
    $region2: #{tpu_custom_call.1} parent=1 // pred_check
      _
    $region3: #{tpu_custom_call.1} parent=1 // pred_check_branch
      %20 = sbr.rel (0) target = $region5
    $region4: #{tpu_custom_call.1} parent=1 // pred_region
      %22 = vsyncadd [#allocation3], 0
      %s23 = sshll.u32 %s0, 4
      %s24 = int_to_ptr.hbm [resolvable:$true] %s23
      %s25 = sshll.u32 [#allocation2], 4
      %s26 = int_to_ptr.vmem [resolvable:$true] %s25
      %31 = dma.hbm_to_vmem [thread:$0]  %s24, 256, %s26, [#allocation3], 128, 128, 8
    $region5: #{tpu_custom_call.1} parent=1 // pred_fallthru
      _
    // Predicated region
    $region6: #{tpu_custom_call.1} parent=1 // pred_check
      _
    $region7: #{tpu_custom_call.1} parent=1 // pred_check_branch
      %33 = sbr.rel (0) target = $region9
    $region8: #{tpu_custom_call.1} parent=1 // pred_region
      %35 = vsyncadd [#allocation6], 0
      %s36 = sshll.u32 %s1, 4
      %s37 = int_to_ptr.hbm [resolvable:$true] %s36
      %s38 = sshll.u32 [#allocation5], 4
      %s39 = int_to_ptr.vmem [resolvable:$true] %s38
      %44 = dma.hbm_to_vmem [thread:$0]  %s37, 256, %s39, [#allocation6], 128, 128, 8
    $region9: #{tpu_custom_call.1} parent=1 // pred_fallthru
      _
    // Predicated region
    $region10: #{tpu_custom_call.1} parent=1 // pred_check
      _
    $region11: #{tpu_custom_call.1} parent=1 // pred_check_branch
      %46 = sbr.rel (0) target = $region13
    $region12: #{tpu_custom_call.1} parent=1 // pred_region
      _
    $region13: #{tpu_custom_call.1} parent=1 // pred_fallthru
      _
    // Predicated region
    $region14: #{tpu_custom_call.1} parent=1 // pred_check
      _
    $region15: #{tpu_custom_call.1} parent=1 // pred_check_branch
      %48 = sbr.rel (0) target = $region17
    $region16: #{tpu_custom_call.1} parent=1 // pred_region
      _
    $region17: #{tpu_custom_call.1} parent=1 // pred_fallthru
      _
    // Predicated region
    $region18: #{tpu_custom_call.1} parent=1 // pred_check
      _
    $region19: #{tpu_custom_call.1} parent=1 // pred_check_branch
      %50 = sbr.rel (0) target = $region21
    $region20: #{tpu_custom_call.1} parent=1 // pred_region
      _
    $region21: #{tpu_custom_call.1} parent=1 // pred_fallthru
      _
    // Predicated region
    $region22: #{tpu_custom_call.1} parent=1 // pred_check
      _
    $region23: #{tpu_custom_call.1} parent=1 // pred_check_branch
      %52 = sbr.rel (0) target = $region25
    $region24: #{tpu_custom_call.1} parent=1 // pred_region
      _
    $region25: #{tpu_custom_call.1} parent=1 // pred_fallthru
      _
    // Predicated region
    $region26: #{tpu_custom_call.1} parent=1 // pred_check
      _
    $region27: #{tpu_custom_call.1} parent=1 // pred_check_branch
      %54 = sbr.rel (0) target = $region29
    $region28: #{tpu_custom_call.1} parent=1 // pred_region
      %56 = vsyncadd [#allocation6], 0
      %s58 = sshll.u32 %s6, 4
      %s59 = int_to_ptr.hbm [resolvable:$true] %s58
      %s60 = sshll.u32 [#allocation7], 4
      %s61 = int_to_ptr.vmem [resolvable:$true] %s60
      %63 = dma.hbm_to_vmem [thread:$0]  %s59, 128, %s61, [#allocation6]
    $region29: #{tpu_custom_call.1} parent=1 // pred_fallthru
      _
    // Predicated region
    $region30: #{tpu_custom_call.1} parent=1 // pred_check
      _
    $region31: #{tpu_custom_call.1} parent=1 // pred_check_branch
      %65 = sbr.rel (0) target = $region33
    $region32: #{tpu_custom_call.1} parent=1 // pred_region
      %67 = dma.done [#allocation3], 256
    $region33: #{tpu_custom_call.1} parent=1 // pred_fallthru
      _
    // Predicated region
    $region34: #{tpu_custom_call.1} parent=1 // pred_check
      _
    $region35: #{tpu_custom_call.1} parent=1 // pred_check_branch
      %69 = sbr.rel (0) target = $region37
    $region36: #{tpu_custom_call.1} parent=1 // pred_region
      %71 = dma.done [#allocation6], 256
    $region37: #{tpu_custom_call.1} parent=1 // pred_fallthru
      _
    // Predicated region
    $region38: #{tpu_custom_call.1} parent=1 // pred_check
      _
    $region39: #{tpu_custom_call.1} parent=1 // pred_check_branch
      %73 = sbr.rel (0) target = $region41
    $region40: #{tpu_custom_call.1} parent=1 // pred_region
      %75 = dma.done [#allocation6], 128
    $region41: #{tpu_custom_call.1} parent=1 // pred_fallthru
      _
    %v76 = vld [vmem:[#allocation2] sm:$0xff]
    %v77 = vld [vmem:[#allocation2 + $0x8] sm:$0xff]
    %v78 = vld [vmem:[#allocation7] sm:$0xff]
    %vm79 = vcmask 261120
    %v80 = vsel %vm79, %v76, 0.0
    %81 = vadd.xlane.f32.xlu0 %v80
    %v82 = vpop.xlane.xlu0 %81
    %v83 = vsel %vm79, %v77, 0.0
    %84 = vadd.xlane.f32.xlu0 %v83
    %v85 = vpop.xlane.xlu0 %84
    %v86 = vrcp.pop 32.0
    %v87 = vmul.f32 32.0, %v86
    %v88 = vsub.f32 1.0, %v87
    %v89 = vmul.f32 %v86, %v88
    %v90 = vadd.f32 %v86, %v89
    %vm91 = vweird.f32 %v86
    %v92 = vsel %vm91, %v86, %v90
    %v93 = vmul.f32 %v82, %v92
    %v94 = vmul.f32 %v85, %v92
    %v95 = vsub.f32 %v76, %v93
    %v96 = vsub.f32 %v77, %v94
    %v97 = vmul.f32 %v95, %v95
    %v98 = vmul.f32 %v96, %v96
    %v99 = vsel %vm79, %v97, 0.0
    %100 = vadd.xlane.f32.xlu0 %v99
    %v101 = vpop.xlane.xlu0 %100
    %v102 = vsel %vm79, %v98, 0.0
    %103 = vadd.xlane.f32.xlu0 %v102
    %v104 = vpop.xlane.xlu0 %103
    %v105 = vmul.f32 %v101, %v92
    %v106 = vmul.f32 %v104, %v92
    %v107 = vadd.f32 %v105, 1e-05
    %v108 = vadd.f32 %v106, 1e-05
    %v109 = vrsqrt.pop %v107
    %v110 = vmul.f32 %v109, %v107
    %v111 = vmul.f32 %v110, %v109
    %v112 = vmul.f32 0.5, %v111
    %v113 = vsub.f32 1.5, %v112
    %v114 = vmul.f32 %v109, %v113
    %vm115 = vweird.f32 %v107
    %vm116 = vweird.f32 %v109
    %vm117 = vmor %vm115, %vm116
    %v118 = vsel %vm117, %v109, %v114
    %v119 = vrsqrt.pop %v108
    %v120 = vmul.f32 %v119, %v108
    %v121 = vmul.f32 %v120, %v119
    %v122 = vmul.f32 0.5, %v121
    %v123 = vsub.f32 1.5, %v122
    %v124 = vmul.f32 %v119, %v123
    %vm125 = vweird.f32 %v108
    %vm126 = vweird.f32 %v119
    %vm127 = vmor %vm125, %vm126
    %v128 = vsel %vm127, %v119, %v124
    %v129 = vmul.f32 %v95, %v118
    %v130 = vmul.f32 %v96, %v128
    %v131 = vperm.slane %v78, 0
    %v132 = vmul.f32 %v129, %v131
    %v133 = vmul.f32 %v130, %v131
    %v134 = vperm.slane %v78, 1
    %v135 = vadd.f32 %v132, %v134
    %v136 = vadd.f32 %v133, %v134
    %v137 = vld [vmem:[%s2] sm:$0xff]
    %v138 = vld [vmem:[%s2 + $0x8] sm:$0xff]
    %v139 = vld [vmem:[%s2 + $0x10] sm:$0xff]
    %v140 = vld [vmem:[%s2 + $0x18] sm:$0xff]
    %v141 = vperm.slane %v78, 2
    %v143 = vsel %vm79, %v135, 0
    %v146 = vsel %vm79, %v136, 0
    %148 = vmatpush.msra.mxu0 0.0
    %149 = vmatpush.msra.mxu0 0.0
    %150 = vmatpush.msra.mxu0 0.0
    %151 = vmatpush.msra.mxu0 0.0
    %152 = vmatpush.msra.mxu0 0.0
    %153 = vmatpush.msra.mxu0 0.0
    %154 = vmatpush.msra.mxu0 0.0
    %155 = vmatpush.msra.mxu0 0.0
    %156 = vmatpush.msra.mxu0 0.0
    %157 = vmatpush.msra.mxu0 0.0
    %158 = vmatpush.msra.mxu0 0.0
    %159 = vmatpush.msra.mxu0 0.0
    %160 = vmatpush.msra.mxu0 %v140
    %161 = vmatpush.msra.mxu0 %v139
    %162 = vmatpush.msra.mxu0 %v138
    %163 = vmatpush.msra.mxu0 %v137
    %164 = vmatmul.f32.gmra.mxu0 %v143
    %v165 = vpop.f32.mrf.mxu0
    %v166 = vadd.f32 %v141, %v165
    %167 = vmatmul.f32.gmra.mxu0 %v146
    %v168 = vpop.f32.mrf.mxu0
    %v169 = vadd.f32 %v141, %v168
    %170 = vdwg.mxu0
    %173 = vrot.lane.b32.xlu0 %v166, 96
    %v174 = vpop.permute.xlu0 %173
    %175 = vrot.lane.b32.xlu0 %v169, 96
    %v176 = vpop.permute.xlu0 %175
    %179 = vst.msk [vmem:[#allocation9] sm:$0xff] %vm79, %v174
    %180 = vst.msk [vmem:[#allocation9 + $0x8] sm:$0xff] %vm79, %v176
    %181 = vrot.lane.b32.xlu0 %v166, 64
    %v182 = vpop.permute.xlu0 %181
    %183 = vrot.lane.b32.xlu0 %v169, 64
    %v184 = vpop.permute.xlu0 %183
    %187 = vst.msk [vmem:[#allocation11] sm:$0xff] %vm79, %v182
    %188 = vst.msk [vmem:[#allocation11 + $0x8] sm:$0xff] %vm79, %v184
    %v189 = vmul.f32 %v166, 0.17677669
    %v190 = vmul.f32 %v169, 0.17677669
    %v191 = vld [vmem:[#allocation5] sm:$0xff]
    %v192 = vld [vmem:[#allocation5 + $0x8] sm:$0xff]
    %vm193 = vcmp.eq.f32.partialorder %v191, 0.0
    %vm194 = vcmp.eq.f32.partialorder %v192, 0.0
    %vm195 = vcmask 64512
    %v197 = vsel %vm195, %v189, 0
    %v199 = vsel %vm195, %v174, 0
    %201 = vmatpush.xpose.msra.mxu0 0.0
    %202 = vmatpush.xpose.msra.mxu0 0.0
    %203 = vmatpush.xpose.msra.mxu0 0.0
    %204 = vmatpush.xpose.msra.mxu0 0.0
    %205 = vmatpush.xpose.msra.mxu0 0.0
    %206 = vmatpush.xpose.msra.mxu0 0.0
    %207 = vmatpush.xpose.msra.mxu0 0.0
    %208 = vmatpush.xpose.msra.mxu0 0.0
    %209 = vmatpush.xpose.msra.mxu0 0.0
    %210 = vmatpush.xpose.msra.mxu0 0.0
    %211 = vmatpush.xpose.msra.mxu0 0.0
    %212 = vmatpush.xpose.msra.mxu0 0.0
    %213 = vmatpush.xpose.msra.mxu0 0.0
    %214 = vmatpush.xpose.msra.mxu0 0.0
    %215 = vmatpush.xpose.msra.mxu0 0.0
    %216 = vmatpush.xpose.msra.mxu0 %v199
    %217 = vmatmul.f32.gmra.mxu0 %v197
    %v218 = vpop.f32.mrf.mxu0
    %v219 = vadd.f32 0.0, %v218
    %220 = vdwg.mxu0
    %v222 = vsel %vm195, %v190, 0
    %v224 = vsel %vm195, %v176, 0
    %226 = vmatpush.xpose.msra.mxu0 0.0
    %227 = vmatpush.xpose.msra.mxu0 0.0
    %228 = vmatpush.xpose.msra.mxu0 0.0
    %229 = vmatpush.xpose.msra.mxu0 0.0
    %230 = vmatpush.xpose.msra.mxu0 0.0
    %231 = vmatpush.xpose.msra.mxu0 0.0
    %232 = vmatpush.xpose.msra.mxu0 0.0
    %233 = vmatpush.xpose.msra.mxu0 0.0
    %234 = vmatpush.xpose.msra.mxu0 0.0
    %235 = vmatpush.xpose.msra.mxu0 0.0
    %236 = vmatpush.xpose.msra.mxu0 0.0
    %237 = vmatpush.xpose.msra.mxu0 0.0
    %238 = vmatpush.xpose.msra.mxu0 0.0
    %239 = vmatpush.xpose.msra.mxu0 0.0
    %240 = vmatpush.xpose.msra.mxu0 0.0
    %241 = vmatpush.xpose.msra.mxu0 %v224
    %242 = vmatmul.f32.gmra.mxu0 %v222
    %v243 = vpop.f32.mrf.mxu0
    %v244 = vadd.f32 0.0, %v243
    %245 = vdwg.mxu0
    %v246 = vsel %vm193, -1000.0, %v219
    %v247 = vsel %vm194, -1000.0, %v244
    %v248 = vsel %vm195, %v246, -inf
    %249 = vmax.xlane.f32.xlu0 %v248
    %v250 = vpop.xlane.xlu0 %249
    %v251 = vsel %vm195, %v247, -inf
    %252 = vmax.xlane.f32.xlu0 %v251
    %v253 = vpop.xlane.xlu0 %252
    %v254 = vsub.f32 %v246, %v250
    %v255 = vsub.f32 %v247, %v253
    %v256 = vmul.f32 %v254, 1.442695
    %v257 = vpow.pop %v256
    %v258 = vmul.f32 %v255, 1.442695
    %v259 = vpow.pop %v258
    %v260 = vsel %vm195, %v257, 0.0
    %261 = vadd.xlane.f32.xlu0 %v260
    %v262 = vpop.xlane.xlu0 %261
    %v263 = vsel %vm195, %v259, 0.0
    %264 = vadd.xlane.f32.xlu0 %v263
    %v265 = vpop.xlane.xlu0 %264
    %v266 = vrcp.pop %v262
    %v267 = vrcp.pop %v265
    %v268 = vmul.f32 %v257, %v266
    %v269 = vmul.f32 %v259, %v267
    %v271 = vsel %vm195, %v268, 0
    %273 = vmatpush.msra.mxu0 0.0
    %274 = vmatpush.msra.mxu0 0.0
    %275 = vmatpush.msra.mxu0 0.0
    %276 = vmatpush.msra.mxu0 0.0
    %277 = vmatpush.msra.mxu0 0.0
    %278 = vmatpush.msra.mxu0 0.0
    %279 = vmatpush.msra.mxu0 0.0
    %280 = vmatpush.msra.mxu0 0.0
    %281 = vmatpush.msra.mxu0 0.0
    %282 = vmatpush.msra.mxu0 0.0
    %283 = vmatpush.msra.mxu0 0.0
    %284 = vmatpush.msra.mxu0 0.0
    %285 = vmatpush.msra.mxu0 0.0
    %286 = vmatpush.msra.mxu0 0.0
    %287 = vmatpush.msra.mxu0 0.0
    %288 = vmatpush.msra.mxu0 %v182
    %289 = vmatmul.f32.gmra.mxu0 %v271
    %v290 = vpop.f32.mrf.mxu0
    %v291 = vadd.f32 0.0, %v290
    %292 = vdwg.mxu0
    %v294 = vsel %vm195, %v269, 0
    %296 = vmatpush.msra.mxu0 0.0
    %297 = vmatpush.msra.mxu0 0.0
    %298 = vmatpush.msra.mxu0 0.0
    %299 = vmatpush.msra.mxu0 0.0
    %300 = vmatpush.msra.mxu0 0.0
    %301 = vmatpush.msra.mxu0 0.0
    %302 = vmatpush.msra.mxu0 0.0
    %303 = vmatpush.msra.mxu0 0.0
    %304 = vmatpush.msra.mxu0 0.0
    %305 = vmatpush.msra.mxu0 0.0
    %306 = vmatpush.msra.mxu0 0.0
    %307 = vmatpush.msra.mxu0 0.0
    %308 = vmatpush.msra.mxu0 0.0
    %309 = vmatpush.msra.mxu0 0.0
    %310 = vmatpush.msra.mxu0 0.0
    %311 = vmatpush.msra.mxu0 %v184
    %312 = vmatmul.f32.gmra.mxu0 %v294
    %v313 = vpop.f32.mrf.mxu0
    %v314 = vadd.f32 0.0, %v313
    %315 = vdwg.mxu0
    %v316 = vld [vmem:[%s3] sm:$0xff]
    %317 = vrot.lane.b32.xlu0 %v189, 120
    %v318 = vpop.permute.xlu0 %317
    %319 = vrot.lane.b32.xlu0 %v166, 88
    %v320 = vpop.permute.xlu0 %319
    %v321 = vsel %vm195, %v318, 0
    %v323 = vsel %vm195, %v320, 0
    %325 = vmatpush.xpose.msra.mxu0 0.0
    %326 = vmatpush.xpose.msra.mxu0 0.0
    %327 = vmatpush.xpose.msra.mxu0 0.0
    %328 = vmatpush.xpose.msra.mxu0 0.0
    %329 = vmatpush.xpose.msra.mxu0 0.0
    %330 = vmatpush.xpose.msra.mxu0 0.0
    %331 = vmatpush.xpose.msra.mxu0 0.0
    %332 = vmatpush.xpose.msra.mxu0 0.0
    %333 = vmatpush.xpose.msra.mxu0 0.0
    %334 = vmatpush.xpose.msra.mxu0 0.0
    %335 = vmatpush.xpose.msra.mxu0 0.0
    %336 = vmatpush.xpose.msra.mxu0 0.0
    %337 = vmatpush.xpose.msra.mxu0 0.0
    %338 = vmatpush.xpose.msra.mxu0 0.0
    %339 = vmatpush.xpose.msra.mxu0 0.0
    %340 = vmatpush.xpose.msra.mxu0 %v323
    %341 = vmatmul.f32.gmra.mxu0 %v321
    %v342 = vpop.f32.mrf.mxu0
    %v343 = vadd.f32 0.0, %v342
    %344 = vdwg.mxu0
    %345 = vrot.lane.b32.xlu0 %v190, 120
    %v346 = vpop.permute.xlu0 %345
    %347 = vrot.lane.b32.xlu0 %v169, 88
    %v348 = vpop.permute.xlu0 %347
    %v349 = vsel %vm195, %v346, 0
    %v351 = vsel %vm195, %v348, 0
    %353 = vmatpush.xpose.msra.mxu0 0.0
    %354 = vmatpush.xpose.msra.mxu0 0.0
    %355 = vmatpush.xpose.msra.mxu0 0.0
    %356 = vmatpush.xpose.msra.mxu0 0.0
    %357 = vmatpush.xpose.msra.mxu0 0.0
    %358 = vmatpush.xpose.msra.mxu0 0.0
    %359 = vmatpush.xpose.msra.mxu0 0.0
    %360 = vmatpush.xpose.msra.mxu0 0.0
    %361 = vmatpush.xpose.msra.mxu0 0.0
    %362 = vmatpush.xpose.msra.mxu0 0.0
    %363 = vmatpush.xpose.msra.mxu0 0.0
    %364 = vmatpush.xpose.msra.mxu0 0.0
    %365 = vmatpush.xpose.msra.mxu0 0.0
    %366 = vmatpush.xpose.msra.mxu0 0.0
    %367 = vmatpush.xpose.msra.mxu0 0.0
    %368 = vmatpush.xpose.msra.mxu0 %v351
    %369 = vmatmul.f32.gmra.mxu0 %v349
    %v370 = vpop.f32.mrf.mxu0
    %v371 = vadd.f32 0.0, %v370
    %372 = vdwg.mxu0
    %v373 = vsel %vm193, -1000.0, %v343
    %v374 = vsel %vm194, -1000.0, %v371
    %v375 = vsel %vm195, %v373, -inf
    %376 = vmax.xlane.f32.xlu0 %v375
    %v377 = vpop.xlane.xlu0 %376
    %v378 = vsel %vm195, %v374, -inf
    %379 = vmax.xlane.f32.xlu0 %v378
    %v380 = vpop.xlane.xlu0 %379
    %v381 = vsub.f32 %v373, %v377
    %v382 = vsub.f32 %v374, %v380
    %v383 = vmul.f32 %v381, 1.442695
    %v384 = vpow.pop %v383
    %v385 = vmul.f32 %v382, 1.442695
    %v386 = vpow.pop %v385
    %v387 = vsel %vm195, %v384, 0.0
    %388 = vadd.xlane.f32.xlu0 %v387
    %v389 = vpop.xlane.xlu0 %388
    %v390 = vsel %vm195, %v386, 0.0
    %391 = vadd.xlane.f32.xlu0 %v390
    %v392 = vpop.xlane.xlu0 %391
    %v393 = vrcp.pop %v389
    %v394 = vrcp.pop %v392
    %v395 = vmul.f32 %v384, %v393
    %v396 = vmul.f32 %v386, %v394
    %397 = vrot.lane.b32.xlu0 %v166, 56
    %v398 = vpop.permute.xlu0 %397
    %v401 = vsel %vm195, %v395, 0
    %403 = vmatpush.msra.mxu0 0.0
    %404 = vmatpush.msra.mxu0 0.0
    %405 = vmatpush.msra.mxu0 0.0
    %406 = vmatpush.msra.mxu0 0.0
    %407 = vmatpush.msra.mxu0 0.0
    %408 = vmatpush.msra.mxu0 0.0
    %409 = vmatpush.msra.mxu0 0.0
    %410 = vmatpush.msra.mxu0 0.0
    %411 = vmatpush.msra.mxu0 0.0
    %412 = vmatpush.msra.mxu0 0.0
    %413 = vmatpush.msra.mxu0 0.0
    %414 = vmatpush.msra.mxu0 0.0
    %415 = vmatpush.msra.mxu0 0.0
    %416 = vmatpush.msra.mxu0 0.0
    %417 = vmatpush.msra.mxu0 0.0
    %418 = vmatpush.msra.mxu0 %v398
    %419 = vmatmul.f32.gmra.mxu0 %v401
    %v420 = vpop.f32.mrf.mxu0
    %v421 = vadd.f32 0.0, %v420
    %422 = vdwg.mxu0
    %423 = vrot.lane.b32.xlu0 %v169, 56
    %v424 = vpop.permute.xlu0 %423
    %v427 = vsel %vm195, %v396, 0
    %429 = vmatpush.msra.mxu0 0.0
    %430 = vmatpush.msra.mxu0 0.0
    %431 = vmatpush.msra.mxu0 0.0
    %432 = vmatpush.msra.mxu0 0.0
    %433 = vmatpush.msra.mxu0 0.0
    %434 = vmatpush.msra.mxu0 0.0
    %435 = vmatpush.msra.mxu0 0.0
    %436 = vmatpush.msra.mxu0 0.0
    %437 = vmatpush.msra.mxu0 0.0
    %438 = vmatpush.msra.mxu0 0.0
    %439 = vmatpush.msra.mxu0 0.0
    %440 = vmatpush.msra.mxu0 0.0
    %441 = vmatpush.msra.mxu0 0.0
    %442 = vmatpush.msra.mxu0 0.0
    %443 = vmatpush.msra.mxu0 0.0
    %444 = vmatpush.msra.mxu0 %v424
    %445 = vmatmul.f32.gmra.mxu0 %v427
    %v446 = vpop.f32.mrf.mxu0
    %v447 = vadd.f32 0.0, %v446
    %448 = vdwg.mxu0
    %v449 = vld [vmem:[%s3 + $0x8] sm:$0xff]
    %v451 = vsel %vm195, %v421, 0
    %v454 = vsel %vm195, %v447, 0
    %456 = vmatpush.msra.mxu0 0.0
    %457 = vmatpush.msra.mxu0 0.0
    %458 = vmatpush.msra.mxu0 0.0
    %459 = vmatpush.msra.mxu0 0.0
    %460 = vmatpush.msra.mxu0 0.0
    %461 = vmatpush.msra.mxu0 0.0
    %462 = vmatpush.msra.mxu0 0.0
    %463 = vmatpush.msra.mxu0 0.0
    %464 = vmatpush.msra.mxu0 0.0
    %465 = vmatpush.msra.mxu0 0.0
    %466 = vmatpush.msra.mxu0 0.0
    %467 = vmatpush.msra.mxu0 0.0
    %468 = vmatpush.msra.mxu0 0.0
    %469 = vmatpush.msra.mxu0 0.0
    %470 = vmatpush.msra.mxu0 0.0
    %471 = vmatpush.msra.mxu0 %v449
    %472 = vmatmul.f32.gmra.mxu0 %v451
    %v473 = vpop.f32.mrf.mxu0
    %v474 = vadd.f32 0.0, %v473
    %475 = vmatmul.f32.gmra.mxu0 %v454
    %v476 = vpop.f32.mrf.mxu0
    %v477 = vadd.f32 0.0, %v476
    %478 = vdwg.mxu0
    %v480 = vsel %vm195, %v291, 0
    %v483 = vsel %vm195, %v314, 0
    %485 = vmatpush.msra.mxu0 0.0
    %486 = vmatpush.msra.mxu0 0.0
    %487 = vmatpush.msra.mxu0 0.0
    %488 = vmatpush.msra.mxu0 0.0
    %489 = vmatpush.msra.mxu0 0.0
    %490 = vmatpush.msra.mxu0 0.0
    %491 = vmatpush.msra.mxu0 0.0
    %492 = vmatpush.msra.mxu0 0.0
    %493 = vmatpush.msra.mxu0 0.0
    %494 = vmatpush.msra.mxu0 0.0
    %495 = vmatpush.msra.mxu0 0.0
    %496 = vmatpush.msra.mxu0 0.0
    %497 = vmatpush.msra.mxu0 0.0
    %498 = vmatpush.msra.mxu0 0.0
    %499 = vmatpush.msra.mxu0 0.0
    %500 = vmatpush.msra.mxu0 %v316
    %501 = vmatmul.f32.gmra.mxu0 %v480
    %v502 = vpop.f32.mrf.mxu0
    %v503 = vadd.f32 %v474, %v502
    %504 = vmatmul.f32.gmra.mxu0 %v483
    %v505 = vpop.f32.mrf.mxu0
    %v506 = vadd.f32 %v477, %v505
    %507 = vdwg.mxu0
    %508 = vrot.lane.b32.xlu0 %v189, 112
    %v509 = vpop.permute.xlu0 %508
    %510 = vrot.lane.b32.xlu0 %v166, 80
    %v511 = vpop.permute.xlu0 %510
    %v512 = vsel %vm195, %v509, 0
    %v514 = vsel %vm195, %v511, 0
    %516 = vmatpush.xpose.msra.mxu0 0.0
    %517 = vmatpush.xpose.msra.mxu0 0.0
    %518 = vmatpush.xpose.msra.mxu0 0.0
    %519 = vmatpush.xpose.msra.mxu0 0.0
    %520 = vmatpush.xpose.msra.mxu0 0.0
    %521 = vmatpush.xpose.msra.mxu0 0.0
    %522 = vmatpush.xpose.msra.mxu0 0.0
    %523 = vmatpush.xpose.msra.mxu0 0.0
    %524 = vmatpush.xpose.msra.mxu0 0.0
    %525 = vmatpush.xpose.msra.mxu0 0.0
    %526 = vmatpush.xpose.msra.mxu0 0.0
    %527 = vmatpush.xpose.msra.mxu0 0.0
    %528 = vmatpush.xpose.msra.mxu0 0.0
    %529 = vmatpush.xpose.msra.mxu0 0.0
    %530 = vmatpush.xpose.msra.mxu0 0.0
    %531 = vmatpush.xpose.msra.mxu0 %v514
    %532 = vmatmul.f32.gmra.mxu0 %v512
    %v533 = vpop.f32.mrf.mxu0
    %v534 = vadd.f32 0.0, %v533
    %535 = vdwg.mxu0
    %536 = vrot.lane.b32.xlu0 %v190, 112
    %v537 = vpop.permute.xlu0 %536
    %538 = vrot.lane.b32.xlu0 %v169, 80
    %v539 = vpop.permute.xlu0 %538
    %v540 = vsel %vm195, %v537, 0
    %v542 = vsel %vm195, %v539, 0
    %544 = vmatpush.xpose.msra.mxu0 0.0
    %545 = vmatpush.xpose.msra.mxu0 0.0
    %546 = vmatpush.xpose.msra.mxu0 0.0
    %547 = vmatpush.xpose.msra.mxu0 0.0
    %548 = vmatpush.xpose.msra.mxu0 0.0
    %549 = vmatpush.xpose.msra.mxu0 0.0
    %550 = vmatpush.xpose.msra.mxu0 0.0
    %551 = vmatpush.xpose.msra.mxu0 0.0
    %552 = vmatpush.xpose.msra.mxu0 0.0
    %553 = vmatpush.xpose.msra.mxu0 0.0
    %554 = vmatpush.xpose.msra.mxu0 0.0
    %555 = vmatpush.xpose.msra.mxu0 0.0
    %556 = vmatpush.xpose.msra.mxu0 0.0
    %557 = vmatpush.xpose.msra.mxu0 0.0
    %558 = vmatpush.xpose.msra.mxu0 0.0
    %559 = vmatpush.xpose.msra.mxu0 %v542
    %560 = vmatmul.f32.gmra.mxu0 %v540
    %v561 = vpop.f32.mrf.mxu0
    %v562 = vadd.f32 0.0, %v561
    %563 = vdwg.mxu0
    %v564 = vsel %vm193, -1000.0, %v534
    %v565 = vsel %vm194, -1000.0, %v562
    %v566 = vsel %vm195, %v564, -inf
    %567 = vmax.xlane.f32.xlu0 %v566
    %v568 = vpop.xlane.xlu0 %567
    %v569 = vsel %vm195, %v565, -inf
    %570 = vmax.xlane.f32.xlu0 %v569
    %v571 = vpop.xlane.xlu0 %570
    %v572 = vsub.f32 %v564, %v568
    %v573 = vsub.f32 %v565, %v571
    %v574 = vmul.f32 %v572, 1.442695
    %v575 = vpow.pop %v574
    %v576 = vmul.f32 %v573, 1.442695
    %v577 = vpow.pop %v576
    %v578 = vsel %vm195, %v575, 0.0
    %579 = vadd.xlane.f32.xlu0 %v578
    %v580 = vpop.xlane.xlu0 %579
    %v581 = vsel %vm195, %v577, 0.0
    %582 = vadd.xlane.f32.xlu0 %v581
    %v583 = vpop.xlane.xlu0 %582
    %v584 = vrcp.pop %v580
    %v585 = vrcp.pop %v583
    %v586 = vmul.f32 %v575, %v584
    %v587 = vmul.f32 %v577, %v585
    %588 = vrot.lane.b32.xlu0 %v166, 48
    %v589 = vpop.permute.xlu0 %588
    %v592 = vsel %vm195, %v586, 0
    %594 = vmatpush.msra.mxu0 0.0
    %595 = vmatpush.msra.mxu0 0.0
    %596 = vmatpush.msra.mxu0 0.0
    %597 = vmatpush.msra.mxu0 0.0
    %598 = vmatpush.msra.mxu0 0.0
    %599 = vmatpush.msra.mxu0 0.0
    %600 = vmatpush.msra.mxu0 0.0
    %601 = vmatpush.msra.mxu0 0.0
    %602 = vmatpush.msra.mxu0 0.0
    %603 = vmatpush.msra.mxu0 0.0
    %604 = vmatpush.msra.mxu0 0.0
    %605 = vmatpush.msra.mxu0 0.0
    %606 = vmatpush.msra.mxu0 0.0
    %607 = vmatpush.msra.mxu0 0.0
    %608 = vmatpush.msra.mxu0 0.0
    %609 = vmatpush.msra.mxu0 %v589
    %610 = vmatmul.f32.gmra.mxu0 %v592
    %v611 = vpop.f32.mrf.mxu0
    %v612 = vadd.f32 0.0, %v611
    %613 = vdwg.mxu0
    %614 = vrot.lane.b32.xlu0 %v169, 48
    %v615 = vpop.permute.xlu0 %614
    %v618 = vsel %vm195, %v587, 0
    %620 = vmatpush.msra.mxu0 0.0
    %621 = vmatpush.msra.mxu0 0.0
    %622 = vmatpush.msra.mxu0 0.0
    %623 = vmatpush.msra.mxu0 0.0
    %624 = vmatpush.msra.mxu0 0.0
    %625 = vmatpush.msra.mxu0 0.0
    %626 = vmatpush.msra.mxu0 0.0
    %627 = vmatpush.msra.mxu0 0.0
    %628 = vmatpush.msra.mxu0 0.0
    %629 = vmatpush.msra.mxu0 0.0
    %630 = vmatpush.msra.mxu0 0.0
    %631 = vmatpush.msra.mxu0 0.0
    %632 = vmatpush.msra.mxu0 0.0
    %633 = vmatpush.msra.mxu0 0.0
    %634 = vmatpush.msra.mxu0 0.0
    %635 = vmatpush.msra.mxu0 %v615
    %636 = vmatmul.f32.gmra.mxu0 %v618
    %v637 = vpop.f32.mrf.mxu0
    %v638 = vadd.f32 0.0, %v637
    %639 = vdwg.mxu0
    %v640 = vld [vmem:[%s3 + $0x10] sm:$0xff]
    %v642 = vsel %vm195, %v612, 0
    %v645 = vsel %vm195, %v638, 0
    %647 = vmatpush.msra.mxu0 0.0
    %648 = vmatpush.msra.mxu0 0.0
    %649 = vmatpush.msra.mxu0 0.0
    %650 = vmatpush.msra.mxu0 0.0
    %651 = vmatpush.msra.mxu0 0.0
    %652 = vmatpush.msra.mxu0 0.0
    %653 = vmatpush.msra.mxu0 0.0
    %654 = vmatpush.msra.mxu0 0.0
    %655 = vmatpush.msra.mxu0 0.0
    %656 = vmatpush.msra.mxu0 0.0
    %657 = vmatpush.msra.mxu0 0.0
    %658 = vmatpush.msra.mxu0 0.0
    %659 = vmatpush.msra.mxu0 0.0
    %660 = vmatpush.msra.mxu0 0.0
    %661 = vmatpush.msra.mxu0 0.0
    %662 = vmatpush.msra.mxu0 %v640
    %663 = vmatmul.f32.gmra.mxu0 %v642
    %v664 = vpop.f32.mrf.mxu0
    %v665 = vadd.f32 0.0, %v664
    %666 = vmatmul.f32.gmra.mxu0 %v645
    %v667 = vpop.f32.mrf.mxu0
    %v668 = vadd.f32 0.0, %v667
    %669 = vdwg.mxu0
    %v670 = vadd.f32 %v503, %v665
    %v671 = vadd.f32 %v506, %v668
    %672 = vrot.lane.b32.xlu0 %v189, 104
    %v673 = vpop.permute.xlu0 %672
    %674 = vrot.lane.b32.xlu0 %v166, 72
    %v675 = vpop.permute.xlu0 %674
    %v676 = vsel %vm195, %v673, 0
    %v678 = vsel %vm195, %v675, 0
    %680 = vmatpush.xpose.msra.mxu0 0.0
    %681 = vmatpush.xpose.msra.mxu0 0.0
    %682 = vmatpush.xpose.msra.mxu0 0.0
    %683 = vmatpush.xpose.msra.mxu0 0.0
    %684 = vmatpush.xpose.msra.mxu0 0.0
    %685 = vmatpush.xpose.msra.mxu0 0.0
    %686 = vmatpush.xpose.msra.mxu0 0.0
    %687 = vmatpush.xpose.msra.mxu0 0.0
    %688 = vmatpush.xpose.msra.mxu0 0.0
    %689 = vmatpush.xpose.msra.mxu0 0.0
    %690 = vmatpush.xpose.msra.mxu0 0.0
    %691 = vmatpush.xpose.msra.mxu0 0.0
    %692 = vmatpush.xpose.msra.mxu0 0.0
    %693 = vmatpush.xpose.msra.mxu0 0.0
    %694 = vmatpush.xpose.msra.mxu0 0.0
    %695 = vmatpush.xpose.msra.mxu0 %v678
    %696 = vmatmul.f32.gmra.mxu0 %v676
    %v697 = vpop.f32.mrf.mxu0
    %v698 = vadd.f32 0.0, %v697
    %699 = vdwg.mxu0
    %700 = vrot.lane.b32.xlu0 %v190, 104
    %v701 = vpop.permute.xlu0 %700
    %702 = vrot.lane.b32.xlu0 %v169, 72
    %v703 = vpop.permute.xlu0 %702
    %v704 = vsel %vm195, %v701, 0
    %v706 = vsel %vm195, %v703, 0
    %708 = vmatpush.xpose.msra.mxu0 0.0
    %709 = vmatpush.xpose.msra.mxu0 0.0
    %710 = vmatpush.xpose.msra.mxu0 0.0
    %711 = vmatpush.xpose.msra.mxu0 0.0
    %712 = vmatpush.xpose.msra.mxu0 0.0
    %713 = vmatpush.xpose.msra.mxu0 0.0
    %714 = vmatpush.xpose.msra.mxu0 0.0
    %715 = vmatpush.xpose.msra.mxu0 0.0
    %716 = vmatpush.xpose.msra.mxu0 0.0
    %717 = vmatpush.xpose.msra.mxu0 0.0
    %718 = vmatpush.xpose.msra.mxu0 0.0
    %719 = vmatpush.xpose.msra.mxu0 0.0
    %720 = vmatpush.xpose.msra.mxu0 0.0
    %721 = vmatpush.xpose.msra.mxu0 0.0
    %722 = vmatpush.xpose.msra.mxu0 0.0
    %723 = vmatpush.xpose.msra.mxu0 %v706
    %724 = vmatmul.f32.gmra.mxu0 %v704
    %v725 = vpop.f32.mrf.mxu0
    %v726 = vadd.f32 0.0, %v725
    %727 = vdwg.mxu0
    %v728 = vsel %vm193, -1000.0, %v698
    %v729 = vsel %vm194, -1000.0, %v726
    %v730 = vsel %vm195, %v728, -inf
    %731 = vmax.xlane.f32.xlu0 %v730
    %v732 = vpop.xlane.xlu0 %731
    %v733 = vsel %vm195, %v729, -inf
    %734 = vmax.xlane.f32.xlu0 %v733
    %v735 = vpop.xlane.xlu0 %734
    %v736 = vsub.f32 %v728, %v732
    %v737 = vsub.f32 %v729, %v735
    %v738 = vmul.f32 %v736, 1.442695
    %v739 = vpow.pop %v738
    %v740 = vmul.f32 %v737, 1.442695
    %v741 = vpow.pop %v740
    %v742 = vsel %vm195, %v739, 0.0
    %743 = vadd.xlane.f32.xlu0 %v742
    %v744 = vpop.xlane.xlu0 %743
    %v745 = vsel %vm195, %v741, 0.0
    %746 = vadd.xlane.f32.xlu0 %v745
    %v747 = vpop.xlane.xlu0 %746
    %v748 = vrcp.pop %v744
    %v749 = vrcp.pop %v747
    %v750 = vmul.f32 %v739, %v748
    %v751 = vmul.f32 %v741, %v749
    %752 = vrot.lane.b32.xlu0 %v166, 40
    %v753 = vpop.permute.xlu0 %752
    %v756 = vsel %vm195, %v750, 0
    %758 = vmatpush.msra.mxu0 0.0
    %759 = vmatpush.msra.mxu0 0.0
    %760 = vmatpush.msra.mxu0 0.0
    %761 = vmatpush.msra.mxu0 0.0
    %762 = vmatpush.msra.mxu0 0.0
    %763 = vmatpush.msra.mxu0 0.0
    %764 = vmatpush.msra.mxu0 0.0
    %765 = vmatpush.msra.mxu0 0.0
    %766 = vmatpush.msra.mxu0 0.0
    %767 = vmatpush.msra.mxu0 0.0
    %768 = vmatpush.msra.mxu0 0.0
    %769 = vmatpush.msra.mxu0 0.0
    %770 = vmatpush.msra.mxu0 0.0
    %771 = vmatpush.msra.mxu0 0.0
    %772 = vmatpush.msra.mxu0 0.0
    %773 = vmatpush.msra.mxu0 %v753
    %774 = vmatmul.f32.gmra.mxu0 %v756
    %v775 = vpop.f32.mrf.mxu0
    %v776 = vadd.f32 0.0, %v775
    %777 = vdwg.mxu0
    %778 = vrot.lane.b32.xlu0 %v169, 40
    %v779 = vpop.permute.xlu0 %778
    %v782 = vsel %vm195, %v751, 0
    %784 = vmatpush.msra.mxu0 0.0
    %785 = vmatpush.msra.mxu0 0.0
    %786 = vmatpush.msra.mxu0 0.0
    %787 = vmatpush.msra.mxu0 0.0
    %788 = vmatpush.msra.mxu0 0.0
    %789 = vmatpush.msra.mxu0 0.0
    %790 = vmatpush.msra.mxu0 0.0
    %791 = vmatpush.msra.mxu0 0.0
    %792 = vmatpush.msra.mxu0 0.0
    %793 = vmatpush.msra.mxu0 0.0
    %794 = vmatpush.msra.mxu0 0.0
    %795 = vmatpush.msra.mxu0 0.0
    %796 = vmatpush.msra.mxu0 0.0
    %797 = vmatpush.msra.mxu0 0.0
    %798 = vmatpush.msra.mxu0 0.0
    %799 = vmatpush.msra.mxu0 %v779
    %800 = vmatmul.f32.gmra.mxu0 %v782
    %v801 = vpop.f32.mrf.mxu0
    %v802 = vadd.f32 0.0, %v801
    %803 = vdwg.mxu0
    %v804 = vld [vmem:[%s3 + $0x18] sm:$0xff]
    %v806 = vsel %vm195, %v776, 0
    %v809 = vsel %vm195, %v802, 0
    %811 = vmatpush.msra.mxu0 0.0
    %812 = vmatpush.msra.mxu0 0.0
    %813 = vmatpush.msra.mxu0 0.0
    %814 = vmatpush.msra.mxu0 0.0
    %815 = vmatpush.msra.mxu0 0.0
    %816 = vmatpush.msra.mxu0 0.0
    %817 = vmatpush.msra.mxu0 0.0
    %818 = vmatpush.msra.mxu0 0.0
    %819 = vmatpush.msra.mxu0 0.0
    %820 = vmatpush.msra.mxu0 0.0
    %821 = vmatpush.msra.mxu0 0.0
    %822 = vmatpush.msra.mxu0 0.0
    %823 = vmatpush.msra.mxu0 0.0
    %824 = vmatpush.msra.mxu0 0.0
    %825 = vmatpush.msra.mxu0 0.0
    %826 = vmatpush.msra.mxu0 %v804
    %827 = vmatmul.f32.gmra.mxu0 %v806
    %v828 = vpop.f32.mrf.mxu0
    %v829 = vadd.f32 0.0, %v828
    %830 = vmatmul.f32.gmra.mxu0 %v809
    %v831 = vpop.f32.mrf.mxu0
    %v832 = vadd.f32 0.0, %v831
    %833 = vdwg.mxu0
    %v834 = vadd.f32 %v670, %v829
    %v835 = vadd.f32 %v671, %v832
    %v836 = vadd.f32 %v76, %v834
    %v837 = vadd.f32 %v77, %v835
    %v838 = vperm.slane %v78, 3
    %v839 = vadd.f32 %v836, %v838
    %v840 = vadd.f32 %v837, %v838
    %v841 = vsel %vm79, %v839, 0.0
    %842 = vadd.xlane.f32.xlu0 %v841
    %v843 = vpop.xlane.xlu0 %842
    %v844 = vsel %vm79, %v840, 0.0
    %845 = vadd.xlane.f32.xlu0 %v844
    %v846 = vpop.xlane.xlu0 %845
    %v847 = vmul.f32 %v843, %v92
    %v848 = vmul.f32 %v846, %v92
    %v849 = vsub.f32 %v839, %v847
    %v850 = vsub.f32 %v840, %v848
    %v851 = vmul.f32 %v849, %v849
    %v852 = vmul.f32 %v850, %v850
    %v853 = vsel %vm79, %v851, 0.0
    %854 = vadd.xlane.f32.xlu0 %v853
    %v855 = vpop.xlane.xlu0 %854
    %v856 = vsel %vm79, %v852, 0.0
    %857 = vadd.xlane.f32.xlu0 %v856
    %v858 = vpop.xlane.xlu0 %857
    %v859 = vmul.f32 %v855, %v92
    %v860 = vmul.f32 %v858, %v92
    %v861 = vadd.f32 %v859, 1e-05
    %v862 = vadd.f32 %v860, 1e-05
    %v863 = vrsqrt.pop %v861
    %v864 = vmul.f32 %v863, %v861
    %v865 = vmul.f32 %v864, %v863
    %v866 = vmul.f32 0.5, %v865
    %v867 = vsub.f32 1.5, %v866
    %v868 = vmul.f32 %v863, %v867
    %vm869 = vweird.f32 %v861
    %vm870 = vweird.f32 %v863
    %vm871 = vmor %vm869, %vm870
    %v872 = vsel %vm871, %v863, %v868
    %v873 = vrsqrt.pop %v862
    %v874 = vmul.f32 %v873, %v862
    %v875 = vmul.f32 %v874, %v873
    %v876 = vmul.f32 0.5, %v875
    %v877 = vsub.f32 1.5, %v876
    %v878 = vmul.f32 %v873, %v877
    %vm879 = vweird.f32 %v862
    %vm880 = vweird.f32 %v873
    %vm881 = vmor %vm879, %vm880
    %v882 = vsel %vm881, %v873, %v878
    %v883 = vmul.f32 %v849, %v872
    %v884 = vmul.f32 %v850, %v882
    %v885 = vperm.slane %v78, 4
    %v886 = vmul.f32 %v883, %v885
    %v887 = vmul.f32 %v884, %v885
    %v888 = vperm.slane %v78, 5
    %v889 = vadd.f32 %v886, %v888
    %v890 = vadd.f32 %v887, %v888
    %v891 = vld [vmem:[%s4] sm:$0xff]
    %v892 = vld [vmem:[%s4 + $0x8] sm:$0xff]
    %v893 = vld [vmem:[%s4 + $0x10] sm:$0xff]
    %v894 = vld [vmem:[%s4 + $0x18] sm:$0xff]
    %v895 = vperm.slane %v78, 6
    %v897 = vsel %vm79, %v889, 0
    %v900 = vsel %vm79, %v890, 0
    %902 = vmatpush.msra.mxu0 0.0
    %903 = vmatpush.msra.mxu0 0.0
    %904 = vmatpush.msra.mxu0 0.0
    %905 = vmatpush.msra.mxu0 0.0
    %906 = vmatpush.msra.mxu0 0.0
    %907 = vmatpush.msra.mxu0 0.0
    %908 = vmatpush.msra.mxu0 0.0
    %909 = vmatpush.msra.mxu0 0.0
    %910 = vmatpush.msra.mxu0 0.0
    %911 = vmatpush.msra.mxu0 0.0
    %912 = vmatpush.msra.mxu0 0.0
    %913 = vmatpush.msra.mxu0 0.0
    %914 = vmatpush.msra.mxu0 %v894
    %915 = vmatpush.msra.mxu0 %v893
    %916 = vmatpush.msra.mxu0 %v892
    %917 = vmatpush.msra.mxu0 %v891
    %918 = vmatmul.f32.gmra.mxu0 %v897
    %v919 = vpop.f32.mrf.mxu0
    %v920 = vadd.f32 %v895, %v919
    %921 = vmatmul.f32.gmra.mxu0 %v900
    %v922 = vpop.f32.mrf.mxu0
    %v923 = vadd.f32 %v895, %v922
    %924 = vdwg.mxu0
    %v925 = vmul.f32 %v920, 0.5
    %v926 = vmul.f32 %v923, 0.5
    %v927 = vmul.f32 %v920, 0.044715
    %v928 = vmul.f32 %v923, 0.044715
    %v929 = vmul.f32 %v927, %v920
    %v930 = vmul.f32 %v928, %v923
    %v931 = vmul.f32 %v929, %v920
    %v932 = vmul.f32 %v930, %v923
    %v933 = vadd.f32 %v920, %v931
    %v934 = vadd.f32 %v923, %v932
    %v935 = vmul.f32 %v933, 0.7978846
    %v936 = vmul.f32 %v934, 0.7978846
    %v937 = vtanh.pop %v935
    %v938 = vtanh.pop %v936
    %v939 = vadd.f32 %v937, 1.0
    %v940 = vadd.f32 %v938, 1.0
    %v941 = vmul.f32 %v925, %v939
    %v942 = vmul.f32 %v926, %v940
    %v943 = vld [vmem:[%s5] sm:$0xff]
    %v944 = vld [vmem:[%s5 + $0x8] sm:$0xff]
    %v945 = vld [vmem:[%s5 + $0x10] sm:$0xff]
    %v946 = vld [vmem:[%s5 + $0x18] sm:$0xff]
    %v947 = vld [vmem:[%s5 + $0x20] sm:$0xff]
    %v948 = vld [vmem:[%s5 + $0x28] sm:$0xff]
    %v949 = vld [vmem:[%s5 + $0x30] sm:$0xff]
    %v950 = vld [vmem:[%s5 + $0x38] sm:$0xff]
    %v951 = vperm.slane %v78, 7
    %vm952 = vcmask 523264
    %v954 = vsel %vm952, %v941, 0
    %v957 = vsel %vm952, %v942, 0
    %959 = vmatpush.msra.mxu0 0.0
    %960 = vmatpush.msra.mxu0 0.0
    %961 = vmatpush.msra.mxu0 0.0
    %962 = vmatpush.msra.mxu0 0.0
    %963 = vmatpush.msra.mxu0 0.0
    %964 = vmatpush.msra.mxu0 0.0
    %965 = vmatpush.msra.mxu0 0.0
    %966 = vmatpush.msra.mxu0 0.0
    %967 = vmatpush.msra.mxu0 %v950
    %968 = vmatpush.msra.mxu0 %v949
    %969 = vmatpush.msra.mxu0 %v948
    %970 = vmatpush.msra.mxu0 %v947
    %971 = vmatpush.msra.mxu0 %v946
    %972 = vmatpush.msra.mxu0 %v945
    %973 = vmatpush.msra.mxu0 %v944
    %974 = vmatpush.msra.mxu0 %v943
    %975 = vmatmul.f32.gmra.mxu0 %v954
    %v976 = vpop.f32.mrf.mxu0
    %v977 = vadd.f32 %v951, %v976
    %978 = vmatmul.f32.gmra.mxu0 %v957
    %v979 = vpop.f32.mrf.mxu0
    %v980 = vadd.f32 %v951, %v979
    %981 = vdwg.mxu0
    %v982 = vadd.f32 %v839, %v977
    %v983 = vadd.f32 %v840, %v980
    %984 = vst.msk [vmem:[#allocation8] sm:$0xff] %vm79, %v982
    %985 = vst.msk [vmem:[#allocation8 + $0x8] sm:$0xff] %vm79, %v983
    // Predicated region
    $region42: #{tpu_custom_call.1} parent=1 // pred_check
      _
    $region43: #{tpu_custom_call.1} parent=1 // pred_check_branch
      %987 = sbr.rel (0) target = $region45
    $region44: #{tpu_custom_call.1} parent=1 // pred_region
      %989 = vsyncadd [#allocation4], 0
      %s990 = sshll.u32 [#allocation8], 4
      %s991 = int_to_ptr.vmem [resolvable:$true] %s990
      %s992 = sshll.u32 %s7, 4
      %s993 = int_to_ptr.hbm [resolvable:$true] %s992
      %998 = dma.vmem_to_hbm [thread:$0]  %s991, 256, %s993, [#allocation4], 128, 128, 8
    $region45: #{tpu_custom_call.1} parent=1 // pred_fallthru
      _
    // Predicated region
    $region46: #{tpu_custom_call.1} parent=1 // pred_check
      _
    $region47: #{tpu_custom_call.1} parent=1 // pred_check_branch
      %1000 = sbr.rel (0) target = $region49
    $region48: #{tpu_custom_call.1} parent=1 // pred_region
      %1002 = vsyncadd [#allocation10], 0
      %s1003 = sshll.u32 [#allocation9], 4
      %s1004 = int_to_ptr.vmem [resolvable:$true] %s1003
      %s1005 = sshll.u32 %s8, 4
      %s1006 = int_to_ptr.hbm [resolvable:$true] %s1005
      %1011 = dma.vmem_to_hbm [thread:$0]  %s1004, 256, %s1006, [#allocation10], 128, 128, 8
    $region49: #{tpu_custom_call.1} parent=1 // pred_fallthru
      _
    // Predicated region
    $region50: #{tpu_custom_call.1} parent=1 // pred_check
      _
    $region51: #{tpu_custom_call.1} parent=1 // pred_check_branch
      %1013 = sbr.rel (0) target = $region53
    $region52: #{tpu_custom_call.1} parent=1 // pred_region
      %1015 = vsyncadd [#allocation10], 0
      %s1016 = sshll.u32 [#allocation11], 4
      %s1017 = int_to_ptr.vmem [resolvable:$true] %s1016
      %s1018 = sshll.u32 %s9, 4
      %s1019 = int_to_ptr.hbm [resolvable:$true] %s1018
      %1024 = dma.vmem_to_hbm [thread:$0]  %s1017, 256, %s1019, [#allocation10], 128, 128, 8
    $region53: #{tpu_custom_call.1} parent=1 // pred_fallthru
      _
    // Predicated region
    $region54: #{tpu_custom_call.1} parent=1 // pred_check
      _
    $region55: #{tpu_custom_call.1} parent=1 // pred_check_branch
      %1026 = sbr.rel (0) target = $region57
    $region56: #{tpu_custom_call.1} parent=1 // pred_region
      %1028 = dma.done [#allocation4], 256
    $region57: #{tpu_custom_call.1} parent=1 // pred_fallthru
      _
    // Predicated region
    $region58: #{tpu_custom_call.1} parent=1 // pred_check
      _
    $region59: #{tpu_custom_call.1} parent=1 // pred_check_branch
      %1030 = sbr.rel (0) target = $region61
    $region60: #{tpu_custom_call.1} parent=1 // pred_region
      %1032 = dma.done [#allocation10], 256
    $region61: #{tpu_custom_call.1} parent=1 // pred_fallthru
      _
    // Predicated region
    $region62: #{tpu_custom_call.1} parent=1 // pred_check
      _
    $region63: #{tpu_custom_call.1} parent=1 // pred_check_branch
      %1034 = sbr.rel (0) target = $region65
    $region64: #{tpu_custom_call.1} parent=1 // pred_region
      %1036 = dma.done [#allocation10], 256
    $region65: #{tpu_custom_call.1} parent=1 // pred_fallthru
      _
    %1037 = vsyncpa [#allocation3], 1
    %1038 = vsyncpa [#allocation6], 1
    %1039 = vsyncpa [#allocation4], 1
    %1040 = vsyncpa [#allocation10], 1

</llo_original>
